<compile_context>
chip_gen: v5e
topology: v5e:2x2
jax: 0.10.0
libtpu: 0.0.40
codegen_flags: <defaults>
</compile_context>

<pallas_src>
import jax
import jax.numpy as jnp
from jax.experimental import pallas as pl
from jax.experimental.pallas import tpu as pltpu


# --------------------------------------------------------------------------- #
# Kernels
# --------------------------------------------------------------------------- #
def _matmul_kernel_f32_out(a_ref, b_ref, o_ref):
    """f32 output: accumulate directly into the VMEM-resident output tile."""

    @pl.when(pl.program_id(2) == 0)
    def _init():
        o_ref[...] = jnp.zeros_like(o_ref)

    o_ref[...] += jnp.dot(
        a_ref[...], b_ref[...], preferred_element_type=jnp.float32
    )


def _matmul_kernel_acc(a_ref, b_ref, o_ref, acc_ref):
    """Narrow output dtype: f32 scratch accumulator, cast once at the end."""

    @pl.when(pl.program_id(2) == 0)
    def _init():
        acc_ref[...] = jnp.zeros_like(acc_ref)

    acc_ref[...] += jnp.dot(
        a_ref[...], b_ref[...], preferred_element_type=jnp.float32
    )

    @pl.when(pl.program_id(2) == pl.num_programs(2) - 1)
    def _store():
        o_ref[...] = acc_ref[...].astype(o_ref.dtype)


# --------------------------------------------------------------------------- #
# Tile / VMEM selection
# --------------------------------------------------------------------------- #
def _round_up(x, m):
    return (x + m - 1) // m * m


def _vmem_capacity_bytes():
    try:
        return int(pltpu.get_tpu_info().vmem_capacity_bytes)
    except Exception:
        return 64 * 1024 * 1024  # conservative (v7x per-TC)


def _largest_aligned_divisor(n, cap, align=128):
    """Largest multiple of `align` that divides n and is <= cap (n % align == 0)."""
    for cand in range(min(cap, n), align - 1, -align):
        if n % cand == 0:
            return cand
    return align


def _choose_tiles(M, N, K, a_dtype, b_dtype, out_dtype):
    vmem_cap = _vmem_capacity_bytes()
    # v5e/v6e (128 MiB VMEM) -> 1024 output tiles; v7x (64 MiB/TC) -> 512.
    target_mn = 1024 if vmem_cap >= 96 * 1024 * 1024 else 512
    target_k = 1024
    vmem_limit = min(vmem_cap * 3 // 4, 100 * 1024 * 1024)

    tm = min(target_mn, _round_up(M, 128))
    tn = min(target_mn, _round_up(N, 128))

    # Keep the reduction axis clean (no garbage may feed valid outputs).
    if K % 128 == 0:
        tk = _largest_aligned_divisor(K, target_k)
        Kp = K
    elif K <= target_k:
        tk = K  # single full-extent K block: no padding, no masking needed
        Kp = K
    else:
        Kp = _round_up(K, 128)  # pad K only (zero pad = mathematical no-op)
        tk = _largest_aligned_divisor(Kp, target_k)

    # Expose >= 2 parallel (i, j) tiles so both v7x TensorCores get work.
    while pl.cdiv(M, tm) * pl.cdiv(N, tn) < 2 and max(tm, tn) > 128:
        if tn >= tm:
            tn = max(128, tn // 2)
        else:
            tm = max(128, tm // 2)

    # Shrink tiles if the double-buffered footprint would overflow the budget.
    a_sz = jnp.dtype(a_dtype).itemsize
    b_sz = jnp.dtype(b_dtype).itemsize
    o_sz = jnp.dtype(out_dtype).itemsize
    need_acc = jnp.dtype(out_dtype) != jnp.dtype(jnp.float32)

    def footprint(tm_, tn_, tk_):
        f = 2 * (tm_ * tk_ * a_sz + tk_ * tn_ * b_sz + tm_ * tn_ * o_sz)
        if need_acc:
            f += tm_ * tn_ * 4
        return f

    budget = int(vmem_limit * 0.85)
    while footprint(tm, tn, tk) > budget:
        if tk > 128 and Kp % 128 == 0:
            tk = _largest_aligned_divisor(Kp, max(128, tk // 2))
        elif tm >= tn and tm > 128:
            tm = max(128, tm // 2)
        elif tn > 128:
            tn = max(128, tn // 2)
        else:
            break

    return tm, tn, tk, Kp, int(vmem_limit)


# --------------------------------------------------------------------------- #
# Wrapper
# --------------------------------------------------------------------------- #
@jax.jit
def pallas_matmul(x1, x2):
    """2-D matmul x1 @ x2 via a tiled Pallas TPU kernel."""
    assert x1.ndim == 2 and x2.ndim == 2, "only 2-D @ 2-D supported"
    M, K = x1.shape
    K2, N = x2.shape
    assert K == K2, f"inner dims must match, got {K} vs {K2}"
    assert jnp.issubdtype(x1.dtype, jnp.floating) and jnp.issubdtype(
        x2.dtype, jnp.floating
    ), "floating dtypes only (no integer MXU path)"

    out_dtype = jnp.result_type(x1.dtype, x2.dtype)
    tm, tn, tk, Kp, vmem_limit = _choose_tiles(
        M, N, K, x1.dtype, x2.dtype, out_dtype
    )

    # Keep operands in their native dtypes (no HBM upcast copies).
    a, b = x1, x2
    if Kp != K:
        # Pad only the reduction axis; M/N boundaries are masked by Pallas.
        a = jnp.pad(a, ((0, 0), (0, Kp - K)))
        b = jnp.pad(b, ((0, Kp - K), (0, 0)))

    gm, gn, gk = pl.cdiv(M, tm), pl.cdiv(N, tn), Kp // tk
    grid = (gm, gn, gk)

    a_sz = jnp.dtype(a.dtype).itemsize
    b_sz = jnp.dtype(b.dtype).itemsize
    o_sz = jnp.dtype(out_dtype).itemsize
    cost = pl.CostEstimate(
        flops=2 * M * N * Kp,
        transcendentals=0,
        # Real traffic of this schedule: A streamed once per N-tile, B once
        # per M-tile, output written once.
        bytes_accessed=int(gn * M * Kp * a_sz + gm * Kp * N * b_sz + M * N * o_sz),
    )

    direct_f32 = jnp.dtype(out_dtype) == jnp.dtype(jnp.float32)
    kernel = _matmul_kernel_f32_out if direct_f32 else _matmul_kernel_acc
    scratch = [] if direct_f32 else [pltpu.VMEM((tm, tn), jnp.float32)]

    return pl.pallas_call(
        kernel,
        out_shape=jax.ShapeDtypeStruct((M, N), out_dtype),
        grid_spec=pltpu.PrefetchScalarGridSpec(
            num_scalar_prefetch=0,
            grid=grid,
            in_specs=[
                pl.BlockSpec((tm, tk), lambda i, j, k: (i, k)),
                pl.BlockSpec((tk, tn), lambda i, j, k: (k, j)),
            ],
            out_specs=pl.BlockSpec((tm, tn), lambda i, j, k: (i, j)),
            scratch_shapes=scratch,
        ),
        compiler_params=pltpu.CompilerParams(
            dimension_semantics=("parallel", "parallel", "arbitrary"),
            vmem_limit_bytes=vmem_limit,
        ),
        cost_estimate=cost,
    )(a, b)


class MatmulPallas:
    """Pallas port of the PyTorch `matmul` module: forward(x1, x2) = x1 @ x2."""

    def __call__(self, x1, x2):
        return pallas_matmul(x1, x2)


if __name__ == "__main__":
    key = jax.random.PRNGKey(0)
    k1, k2 = jax.random.split(key)

    # Small, non-square shapes; K=384 exercises the "tk divides K" path and
    # M=256 < tile target exercises the tile-clamp / >=2-parallel-tiles path.
    M, K, N = 256, 384, 512
    x1 = jax.random.normal(k1, (M, K), jnp.float32)
    x2 = jax.random.normal(k2, (K, N), jnp.float32)

    module = MatmulPallas()
    out = module(x1, x2)
    out = jax.block_until_ready(out)

    ref = x1 @ x2
    assert out.shape == (M, N), out.shape
    assert bool(jnp.all(jnp.isfinite(out)))
    rel_err = jnp.max(jnp.abs(out - ref)) / (jnp.max(jnp.abs(ref)) + 1e-6)
    assert float(rel_err) < 2e-2, float(rel_err)
    print("KERNEL_OK")
</pallas_src>

<mosaic_0001>
module attributes {stable_mosaic.version = 11 : i64} {
  func.func @_matmul_kernel_f32_out(%arg0: i32, %arg1: i32, %arg2: i32, %arg3: memref<256x384xf32, #tpu.memory_space<vmem>>, %arg4: memref<384x256xf32, #tpu.memory_space<vmem>>, %arg5: memref<256x256xf32, #tpu.memory_space<vmem>>) attributes {dimension_semantics = [#tpu.dimension_semantics<parallel>, #tpu.dimension_semantics<parallel>, #tpu.dimension_semantics<arbitrary>], iteration_bounds = array<i64: 1, 2, 1>, scalar_prefetch = 0 : i64, scratch_operands = 0 : i64, tpu.core_type = #tpu.core_type<tc>, window_params = [{transform_indices = @transform_0, window_bounds = array<i64: 256, 384>}, {transform_indices = @transform_1, window_bounds = array<i64: 384, 256>}, {transform_indices = @transform_2, window_bounds = array<i64: 256, 256>}]} {
    %c0_i32 = arith.constant 0 : i32
    %0 = arith.cmpi eq, %arg2, %c0_i32 : i32
    %1 = arith.extui %0 : i1 to i32
    %c0_i32_0 = arith.constant 0 : i32
    %2 = arith.cmpi ne, %1, %c0_i32_0 : i32
    scf.if %2 {
      %cst_8 = arith.constant 0.000000e+00 : f32
      %9 = vector.broadcast %cst_8 : f32 to vector<256x256xf32>
      %c0_9 = arith.constant 0 : index
      %c0_10 = arith.constant 0 : index
      %10 = vector.load %arg5[%c0_9, %c0_10] : memref<256x256xf32, #tpu.memory_space<vmem>>, vector<256x256xf32>
      tpu.vector_store %arg5[%c0_9, %c0_10], %9 {strides = array<i32>} : memref<256x256xf32, #tpu.memory_space<vmem>>, vector<256x256xf32>,
    } else {
    }
    %c0 = arith.constant 0 : index
    %c0_1 = arith.constant 0 : index
    %3 = vector.load %arg5[%c0, %c0_1] : memref<256x256xf32, #tpu.memory_space<vmem>>, vector<256x256xf32>
    %c0_2 = arith.constant 0 : index
    %c0_3 = arith.constant 0 : index
    %4 = vector.load %arg3[%c0_2, %c0_3] : memref<256x384xf32, #tpu.memory_space<vmem>>, vector<256x384xf32>
    %c0_4 = arith.constant 0 : index
    %c0_5 = arith.constant 0 : index
    %5 = vector.load %arg4[%c0_4, %c0_5] : memref<384x256xf32, #tpu.memory_space<vmem>>, vector<384x256xf32>
    %cst = arith.constant dense<0.000000e+00> : vector<256x256xf32>
    %6 = tpu.matmul %4, %5, %cst {dimension_numbers = #tpu.dot_dimension_numbers<[1], [0], [0], [1], [0, 0, 1, 1], [], []>} : vector<256x384xf32>, vector<384x256xf32>, vector<256x256xf32> -> vector<256x256xf32>
    %7 = arith.addf %3, %6 : vector<256x256xf32>
    %c0_6 = arith.constant 0 : index
    %c0_7 = arith.constant 0 : index
    %8 = vector.load %arg5[%c0_6, %c0_7] : memref<256x256xf32, #tpu.memory_space<vmem>>, vector<256x256xf32>
    tpu.vector_store %arg5[%c0_6, %c0_7], %7 {strides = array<i32>} : memref<256x256xf32, #tpu.memory_space<vmem>>, vector<256x256xf32>,
    return
  }
  func.func @transform_0(%arg0: i32, %arg1: i32, %arg2: i32) -> (i32, i32) {
    %c0_i32 = arith.constant 0 : i32
    return %arg0, %arg2 : i32, i32
  }
  func.func @transform_1(%arg0: i32, %arg1: i32, %arg2: i32) -> (i32, i32) {
    %c0_i32 = arith.constant 0 : i32
    return %arg2, %arg1 : i32, i32
  }
  func.func @transform_2(%arg0: i32, %arg1: i32, %arg2: i32) -> (i32, i32) {
    %c0_i32 = arith.constant 0 : i32
    return %arg0, %arg1 : i32, i32
  }
}

</mosaic_0001>

<llo_original>
// kernel: pallas_matmul.1
$region0: #{pallas_matmul.1}
  #allocation0 [shape = 'u32[]', space=smem, size = 0x4, offset = 0x4, fixed_abs, tag = 'smem constant byte address 0x4 - core index']
  #allocation1 [shape = 'u32[72,128]{1,0:T(1,128)}', space=vmem, size = 0x9000, scoped, tag = 'internal scratch']
  %s0 = inlined_call_operand.hbm [shape: f32[256,384], index: 0, kind: input, shape index: {}]
  %s1 = inlined_call_operand.hbm [shape: f32[384,512], index: 1, kind: input, shape index: {}]
  %s2 = inlined_call_operand.hbm [shape: f32[256,512], index: 2, kind: output, shape index: {}]
  %s3 = sld [smem:[#allocation0]]
  $region53: #{pallas_matmul.1} parent=0
    _
  %s5 = ssub.s32 1, %s3
  %s6 = scalar_select 0, %s5, %s3
  $region1: #{pallas_matmul.1} parent=0
    #allocation2 [shape = 'u8[393216]{0}', space=vmem, size = 0x60000, scoped, tag = 'input window, operand 0, single buffered']
    #allocation3 [shape = 's32[2]{0}', space=sflag, size = 0x8, scoped, tag = 'scoped memory for pallas_matmul.1']
    #allocation4 [shape = 's32[2]{0}', space=sflag, size = 0x8, scoped, tag = 'scoped memory for pallas_matmul.1']
    #allocation5 [shape = 'u8[786432]{0}', space=vmem, size = 0xc0000, scoped, tag = 'input window, operand 1']
    #allocation6 [shape = 's32[2]{0}', space=sflag, size = 0x8, scoped, tag = 'scoped memory for pallas_matmul.1']
    #allocation7 [shape = 'u8[524288]{0}', space=vmem, size = 0x80000, scoped, tag = 'output window, operand 0']
    %7 = vsyncpa [#allocation3], 0
    %8 = vsyncpa [#allocation6], 0
    %s9 = scalar_lea.sflag [#allocation6], 1
    %10 = vsyncpa %s9, 0
    %11 = vsyncpa [#allocation4], 0
    %s12 = scalar_lea.sflag [#allocation4], 1
    %13 = vsyncpa %s12, 0
    loop: start=0, step=1, limit=4
    $region2: #{pallas_matmul.1} parent=1 // loop_pre_header
      _
    $region3: #{pallas_matmul.1} parent=1 // loop_header
      %s15 = sphi 0, %s19
      %p16 = scmp.ge.s32.totalorder %s15, 4
      %s22 = sphi 0, %s41
      %s23 = sphi 0, %s37
      %s24 = sphi 0, %s33
      %s25 = sphi 0, %s22
      %s26 = sphi 0, %s23
      %s27 = sphi 0, %s24
      %s28 = sphi 0, %s25
      %s29 = sphi 0, %s26
      %s30 = sphi 0, %s27
      %s46 = sphi 0, %s48
      %s49 = sphi 0, %s46
      %s50 = sphi 0, %s49
      %s66 = sphi 0, %s50
      %s74 = sphi 0, %s76
      %s77 = sphi 0, %s74
      %s78 = sphi 0, %s77
      %s94 = sphi 0, %s78
      %s102 = sphi 0, %s104
      %s105 = sphi 0, %s102
      %s106 = sphi 0, %s105
      %s122 = sphi 0, %s106
    $region4: #{pallas_matmul.1} parent=1 // loop_header_branch
      %18 = sbr.rel (%p16) target = $region8
    $region5: #{pallas_matmul.1} parent=1 // loop_body
      %s20 = ssub.s32 %s15, 1
      %s21 = ssub.s32 %s15, 2
      %s31 = sadd.s32 1, %s24
      %p32 = scmp.ge.s32.totalorder %s31, 1
      %s33 = scalar_select %p32, 0, %s31
      %s34 = sadd.s32 1, %s23
      %s35 = scalar_select %p32, %s34, %s23
      %p36 = scmp.ge.s32.totalorder %s35, 2
      %s37 = scalar_select %p36, 0, %s35
      %s38 = sadd.s32 1, %s22
      %s39 = scalar_select %p36, %s38, %s22
      %p40 = scmp.ge.s32.totalorder %s39, 1
      %s41 = scalar_select %p40, 0, %s39
      %s42 = ssub.s32 %s22, %s41
      %s43 = ssub.s32 %s24, %s33
      %s44 = sor.u32 %s42, %s43
      %p45 = scmp.eq.s32.totalorder %s44, 0
      %s47 = sadd.s32 %s46, 1
      %s48 = scalar_select %p45, %s46, %s47
      %p51 = pneg %p45
      %p52 = scmp.eq.s32.totalorder %s15, 1
      %p53 = por %p51, %p52
      %p54 = scmp.ne.s32.totalorder %s46, %s49
      %p55 = scmp.eq.s32.totalorder %s15, 0
      %p56 = por %p54, %p55
      %p57 = scmp.ne.s32.totalorder %s46, %s49
      %p58 = scmp.eq.s32.totalorder %s20, 1
      %p59 = por %p57, %p58
      %p60 = scmp.ne.s32.totalorder %s49, %s50
      %p61 = scmp.eq.s32.totalorder %s20, 0
      %p62 = por %p60, %p61
      %p63 = scmp.ne.s32.totalorder %s49, %s50
      %p64 = scmp.eq.s32.totalorder %s21, 1
      %p65 = por %p63, %p64
      %p67 = scmp.ne.s32.totalorder %s50, %s66
      %p68 = scmp.eq.s32.totalorder %s21, 0
      %p69 = por %p67, %p68
      %s70 = ssub.s32 %s24, %s33
      %s71 = ssub.s32 %s23, %s37
      %s72 = sor.u32 %s70, %s71
      %p73 = scmp.eq.s32.totalorder %s72, 0
      %s75 = sadd.s32 %s74, 1
      %s76 = scalar_select %p73, %s74, %s75
      %p79 = pneg %p73
      %p80 = scmp.eq.s32.totalorder %s15, 1
      %p81 = por %p79, %p80
      %p82 = scmp.ne.s32.totalorder %s74, %s77
      %p83 = scmp.eq.s32.totalorder %s15, 0
      %p84 = por %p82, %p83
      %p85 = scmp.ne.s32.totalorder %s74, %s77
      %p86 = scmp.eq.s32.totalorder %s20, 1
      %p87 = por %p85, %p86
      %p88 = scmp.ne.s32.totalorder %s77, %s78
      %p89 = scmp.eq.s32.totalorder %s20, 0
      %p90 = por %p88, %p89
      %p91 = scmp.ne.s32.totalorder %s77, %s78
      %p92 = scmp.eq.s32.totalorder %s21, 1
      %p93 = por %p91, %p92
      %p95 = scmp.ne.s32.totalorder %s78, %s94
      %p96 = scmp.eq.s32.totalorder %s21, 0
      %p97 = por %p95, %p96
      %s98 = ssub.s32 %s22, %s41
      %s99 = ssub.s32 %s23, %s37
      %s100 = sor.u32 %s98, %s99
      %p101 = scmp.eq.s32.totalorder %s100, 0
      %s103 = sadd.s32 %s102, 1
      %s104 = scalar_select %p101, %s102, %s103
      %p107 = pneg %p101
      %p108 = scmp.eq.s32.totalorder %s15, 1
      %p109 = por %p107, %p108
      %p110 = scmp.ne.s32.totalorder %s102, %s105
      %p111 = scmp.eq.s32.totalorder %s15, 0
      %p112 = por %p110, %p111
      %p113 = scmp.ne.s32.totalorder %s102, %s105
      %p114 = scmp.eq.s32.totalorder %s20, 1
      %p115 = por %p113, %p114
      %p116 = scmp.ne.s32.totalorder %s105, %s106
      %p117 = scmp.eq.s32.totalorder %s20, 0
      %p118 = por %p116, %p117
      %p119 = scmp.ne.s32.totalorder %s105, %s106
      %p120 = scmp.eq.s32.totalorder %s21, 1
      %p121 = por %p119, %p120
      %p123 = scmp.ne.s32.totalorder %s106, %s122
      %p124 = scmp.eq.s32.totalorder %s21, 0
      %p125 = por %p123, %p124
      %p126 = scmp.le.s32.totalorder 1, %s15
      %p127 = scmp.lt.s32.totalorder %s15, 3
      %p128 = pnand %p126, %p127
      %p129 = pneg %p128
      // Predicated region
      $region9: #{pallas_matmul.1} parent=5 // pred_check
        _
      $region10: #{pallas_matmul.1} parent=5 // pred_check_branch
        %131 = sbr.rel (%p128) target = $region12
      $region11: #{pallas_matmul.1} parent=5 // pred_region
        %s132 = ssub.s32 %s15, 1
        // Predicated region
        $region13: #{pallas_matmul.1} parent=11 // pred_check
          %p133 = pneg %p62
        $region14: #{pallas_matmul.1} parent=11 // pred_check_branch
          %135 = sbr.rel (%p133) target = $region16
        $region15: #{pallas_matmul.1} parent=11 // pred_region
          %s136 = smul.u32 32, %s25
          %s137 = smul.u32 3, %s27
          %139 = vsyncadd [#allocation3], 0
          %s140 = smul.addr %s136, 3
          %s141 = sadd.s32 %s137, %s140
          %s142 = smul.addr %s141, 8
          %s143 = scalar_lea.hbm %s0, %s142
          %s144 = sshll.u32 %s143, 4
          %s145 = int_to_ptr.hbm [resolvable:$true] %s144
          %s146 = sshll.u32 [#allocation2], 4
          %s147 = int_to_ptr.vmem [resolvable:$true] %s146
          %152 = dma.hbm_to_vmem [thread:$0]  %s145, 12288, %s147, [#allocation3], 384, 384, 24
        $region16: #{pallas_matmul.1} parent=11 // pred_fallthru
          _
      $region12: #{pallas_matmul.1} parent=5 // pred_fallthru
        _
      %p153 = scmp.lt.s32.totalorder %s15, 2
      // Predicated region
      $region17: #{pallas_matmul.1} parent=5 // pred_check
        %p154 = pneg %p153
      $region18: #{pallas_matmul.1} parent=5 // pred_check_branch
        %156 = sbr.rel (%p154) target = $region20
      $region19: #{pallas_matmul.1} parent=5 // pred_region
        // Predicated region
        $region21: #{pallas_matmul.1} parent=19 // pred_check
          %p157 = pneg %p84
        $region22: #{pallas_matmul.1} parent=19 // pred_check_branch
          %159 = sbr.rel (%p157) target = $region24
        $region23: #{pallas_matmul.1} parent=19 // pred_region
          %s160 = sand.u32 %s74, 1
          %s161 = scalar_lea.sflag [#allocation6], %s160
          %s162 = sand.u32 %s74, 1
          %s163 = smul.addr %s162, 768
          %s164 = scalar_lea.vmem [#allocation5], %s163
          %s165 = smul.u32 48, %s24
          %s166 = smul.u32 2, %s23
          %168 = vsyncadd %s161, 0
          %s169 = smul.addr %s165, 4
          %s170 = sadd.s32 %s166, %s169
          %s171 = smul.addr %s170, 8
          %s172 = scalar_lea.hbm %s1, %s171
          %s173 = sshll.u32 %s172, 4
          %s174 = int_to_ptr.hbm [resolvable:$true] %s173
          %s175 = sshll.u32 %s164, 4
          %s176 = int_to_ptr.vmem [resolvable:$true] %s175
          %181 = dma.hbm_to_vmem [thread:$0]  %s174, 12288, %s176, %s161, 512, 256, 16
        $region24: #{pallas_matmul.1} parent=19 // pred_fallthru
          _
      $region20: #{pallas_matmul.1} parent=5 // pred_fallthru
        _
      %p182 = scmp.le.s32.totalorder 1, %s15
      %p183 = scmp.lt.s32.totalorder %s15, 3
      %p184 = pnand %p182, %p183
      %p185 = pneg %p184
      // Predicated region
      $region25: #{pallas_matmul.1} parent=5 // pred_check
        _
      $region26: #{pallas_matmul.1} parent=5 // pred_check_branch
        %187 = sbr.rel (%p184) target = $region28
      $region27: #{pallas_matmul.1} parent=5 // pred_region
        %s188 = ssub.s32 %s15, 1
        // Predicated region
        $region29: #{pallas_matmul.1} parent=27 // pred_check
          %p189 = pneg %p62
        $region30: #{pallas_matmul.1} parent=27 // pred_check_branch
          %191 = sbr.rel (%p189) target = $region32
        $region31: #{pallas_matmul.1} parent=27 // pred_region
          %193 = dma.done [#allocation3], 12288
        $region32: #{pallas_matmul.1} parent=27 // pred_fallthru
          _
        %s194 = sand.u32 %s77, 1
        %s195 = scalar_lea.sflag [#allocation6], %s194
        %s196 = sand.u32 %s77, 1
        %s197 = smul.addr %s196, 768
        %s198 = scalar_lea.vmem [#allocation5], %s197
        // Predicated region
        $region33: #{pallas_matmul.1} parent=27 // pred_check
          %p199 = pneg %p90
        $region34: #{pallas_matmul.1} parent=27 // pred_check_branch
          %201 = sbr.rel (%p199) target = $region36
        $region35: #{pallas_matmul.1} parent=27 // pred_region
          %203 = dma.done %s195, 12288
        $region36: #{pallas_matmul.1} parent=27 // pred_fallthru
          _
        %p204 = pneg %p62
        %p205 = pneg %p59
        %s206 = sand.u32 %s77, 1
        %s207 = scalar_lea.sflag [#allocation6], %s206
        %s208 = sand.u32 %s77, 1
        %s209 = smul.addr %s208, 768
        %s210 = scalar_lea.vmem [#allocation5], %s209
        %p211 = pneg %p90
        %p212 = pneg %p87
        %p213 = pneg %p118
        %p214 = pneg %p115
        %s215 = sand.u32 %s105, 1
        %s216 = scalar_lea.sflag [#allocation4], %s215
        %s217 = sand.u32 %s105, 1
        %s218 = smul.addr %s217, 512
        %s219 = scalar_lea.vmem [#allocation7], %s218
        %s220 = smul.u32 32, %s25
        %s221 = smul.u32 3, %s27
        %s222 = smul.u32 48, %s27
        %s223 = smul.u32 2, %s26
        %s224 = smul.u32 32, %s25
        %s225 = smul.u32 2, %s26
        %p226 = scmp.eq.s32.totalorder %s27, 0
        // Predicated region
        $region37: #{pallas_matmul.1} parent=27 // pred_check
          %p227 = pneg %p226
        $region38: #{pallas_matmul.1} parent=27 // pred_check_branch
          %229 = sbr.rel (%p227) target = $region40
        $region39: #{pallas_matmul.1} parent=27 // pred_region
          %230 = vst [vmem:[%s219] sm:$0xff] 0.0
          %231 = vst [vmem:[%s219 + $0x8] sm:$0xff] 0.0
          %232 = vst [vmem:[%s219 + $0x10] sm:$0xff] 0.0
          %233 = vst [vmem:[%s219 + $0x18] sm:$0xff] 0.0
          %234 = vst [vmem:[%s219 + $0x20] sm:$0xff] 0.0
          %235 = vst [vmem:[%s219 + $0x28] sm:$0xff] 0.0
          %236 = vst [vmem:[%s219 + $0x30] sm:$0xff] 0.0
          %237 = vst [vmem:[%s219 + $0x38] sm:$0xff] 0.0
          %238 = vst [vmem:[%s219 + $0x40] sm:$0xff] 0.0
          %239 = vst [vmem:[%s219 + $0x48] sm:$0xff] 0.0
          %240 = vst [vmem:[%s219 + $0x50] sm:$0xff] 0.0
          %241 = vst [vmem:[%s219 + $0x58] sm:$0xff] 0.0
          %242 = vst [vmem:[%s219 + $0x60] sm:$0xff] 0.0
          %243 = vst [vmem:[%s219 + $0x68] sm:$0xff] 0.0
          %244 = vst [vmem:[%s219 + $0x70] sm:$0xff] 0.0
          %245 = vst [vmem:[%s219 + $0x78] sm:$0xff] 0.0
          %246 = vst [vmem:[%s219 + $0x80] sm:$0xff] 0.0
          %247 = vst [vmem:[%s219 + $0x88] sm:$0xff] 0.0
          %248 = vst [vmem:[%s219 + $0x90] sm:$0xff] 0.0
          %249 = vst [vmem:[%s219 + $0x98] sm:$0xff] 0.0
          %250 = vst [vmem:[%s219 + $0xa0] sm:$0xff] 0.0
          %251 = vst [vmem:[%s219 + $0xa8] sm:$0xff] 0.0
          %252 = vst [vmem:[%s219 + $0xb0] sm:$0xff] 0.0
          %253 = vst [vmem:[%s219 + $0xb8] sm:$0xff] 0.0
          %254 = vst [vmem:[%s219 + $0xc0] sm:$0xff] 0.0
          %255 = vst [vmem:[%s219 + $0xc8] sm:$0xff] 0.0
          %256 = vst [vmem:[%s219 + $0xd0] sm:$0xff] 0.0
          %257 = vst [vmem:[%s219 + $0xd8] sm:$0xff] 0.0
          %258 = vst [vmem:[%s219 + $0xe0] sm:$0xff] 0.0
          %259 = vst [vmem:[%s219 + $0xe8] sm:$0xff] 0.0
          %260 = vst [vmem:[%s219 + $0xf0] sm:$0xff] 0.0
          %261 = vst [vmem:[%s219 + $0xf8] sm:$0xff] 0.0
          %262 = vst [vmem:[%s219 + $0x100] sm:$0xff] 0.0
          %263 = vst [vmem:[%s219 + $0x108] sm:$0xff] 0.0
          %264 = vst [vmem:[%s219 + $0x110] sm:$0xff] 0.0
          %265 = vst [vmem:[%s219 + $0x118] sm:$0xff] 0.0
          %266 = vst [vmem:[%s219 + $0x120] sm:$0xff] 0.0
          %267 = vst [vmem:[%s219 + $0x128] sm:$0xff] 0.0
          %268 = vst [vmem:[%s219 + $0x130] sm:$0xff] 0.0
          %269 = vst [vmem:[%s219 + $0x138] sm:$0xff] 0.0
          %270 = vst [vmem:[%s219 + $0x140] sm:$0xff] 0.0
          %271 = vst [vmem:[%s219 + $0x148] sm:$0xff] 0.0
          %272 = vst [vmem:[%s219 + $0x150] sm:$0xff] 0.0
          %273 = vst [vmem:[%s219 + $0x158] sm:$0xff] 0.0
          %274 = vst [vmem:[%s219 + $0x160] sm:$0xff] 0.0
          %275 = vst [vmem:[%s219 + $0x168] sm:$0xff] 0.0
          %276 = vst [vmem:[%s219 + $0x170] sm:$0xff] 0.0
          %277 = vst [vmem:[%s219 + $0x178] sm:$0xff] 0.0
          %278 = vst [vmem:[%s219 + $0x180] sm:$0xff] 0.0
          %279 = vst [vmem:[%s219 + $0x188] sm:$0xff] 0.0
          %280 = vst [vmem:[%s219 + $0x190] sm:$0xff] 0.0
          %281 = vst [vmem:[%s219 + $0x198] sm:$0xff] 0.0
          %282 = vst [vmem:[%s219 + $0x1a0] sm:$0xff] 0.0
          %283 = vst [vmem:[%s219 + $0x1a8] sm:$0xff] 0.0
          %284 = vst [vmem:[%s219 + $0x1b0] sm:$0xff] 0.0
          %285 = vst [vmem:[%s219 + $0x1b8] sm:$0xff] 0.0
          %286 = vst [vmem:[%s219 + $0x1c0] sm:$0xff] 0.0
          %287 = vst [vmem:[%s219 + $0x1c8] sm:$0xff] 0.0
          %288 = vst [vmem:[%s219 + $0x1d0] sm:$0xff] 0.0
          %289 = vst [vmem:[%s219 + $0x1d8] sm:$0xff] 0.0
          %290 = vst [vmem:[%s219 + $0x1e0] sm:$0xff] 0.0
          %291 = vst [vmem:[%s219 + $0x1e8] sm:$0xff] 0.0
          %292 = vst [vmem:[%s219 + $0x1f0] sm:$0xff] 0.0
          %293 = vst [vmem:[%s219 + $0x1f8] sm:$0xff] 0.0
        $region40: #{pallas_matmul.1} parent=27 // pred_fallthru
          _
        %v294 = vld [vmem:[%s219] sm:$0xff]
        %v295 = vld [vmem:[%s219 + $0x8] sm:$0xff]
        %v296 = vld [vmem:[%s219 + $0x10] sm:$0xff]
        %v297 = vld [vmem:[%s219 + $0x18] sm:$0xff]
        %v298 = vld [vmem:[%s219 + $0x20] sm:$0xff]
        %v299 = vld [vmem:[%s219 + $0x28] sm:$0xff]
        %v300 = vld [vmem:[%s219 + $0x30] sm:$0xff]
        %v301 = vld [vmem:[%s219 + $0x38] sm:$0xff]
        %v302 = vld [vmem:[%s219 + $0x40] sm:$0xff]
        %v303 = vld [vmem:[%s219 + $0x48] sm:$0xff]
        %v304 = vld [vmem:[%s219 + $0x50] sm:$0xff]
        %v305 = vld [vmem:[%s219 + $0x58] sm:$0xff]
        %v306 = vld [vmem:[%s219 + $0x60] sm:$0xff]
        %v307 = vld [vmem:[%s219 + $0x68] sm:$0xff]
        %v308 = vld [vmem:[%s219 + $0x70] sm:$0xff]
        %v309 = vld [vmem:[%s219 + $0x78] sm:$0xff]
        %v310 = vld [vmem:[%s219 + $0x80] sm:$0xff]
        %v311 = vld [vmem:[%s219 + $0x88] sm:$0xff]
        %v312 = vld [vmem:[%s219 + $0x90] sm:$0xff]
        %v313 = vld [vmem:[%s219 + $0x98] sm:$0xff]
        %v314 = vld [vmem:[%s219 + $0xa0] sm:$0xff]
        %v315 = vld [vmem:[%s219 + $0xa8] sm:$0xff]
        %v316 = vld [vmem:[%s219 + $0xb0] sm:$0xff]
        %v317 = vld [vmem:[%s219 + $0xb8] sm:$0xff]
        %v318 = vld [vmem:[%s219 + $0xc0] sm:$0xff]
        %v319 = vld [vmem:[%s219 + $0xc8] sm:$0xff]
        %v320 = vld [vmem:[%s219 + $0xd0] sm:$0xff]
        %v321 = vld [vmem:[%s219 + $0xd8] sm:$0xff]
        %v322 = vld [vmem:[%s219 + $0xe0] sm:$0xff]
        %v323 = vld [vmem:[%s219 + $0xe8] sm:$0xff]
        %v324 = vld [vmem:[%s219 + $0xf0] sm:$0xff]
        %v325 = vld [vmem:[%s219 + $0xf8] sm:$0xff]
        %v326 = vld [vmem:[%s219 + $0x100] sm:$0xff]
        %v327 = vld [vmem:[%s219 + $0x108] sm:$0xff]
        %v328 = vld [vmem:[%s219 + $0x110] sm:$0xff]
        %v329 = vld [vmem:[%s219 + $0x118] sm:$0xff]
        %v330 = vld [vmem:[%s219 + $0x120] sm:$0xff]
        %v331 = vld [vmem:[%s219 + $0x128] sm:$0xff]
        %v332 = vld [vmem:[%s219 + $0x130] sm:$0xff]
        %v333 = vld [vmem:[%s219 + $0x138] sm:$0xff]
        %v334 = vld [vmem:[%s219 + $0x140] sm:$0xff]
        %v335 = vld [vmem:[%s219 + $0x148] sm:$0xff]
        %v336 = vld [vmem:[%s219 + $0x150] sm:$0xff]
        %v337 = vld [vmem:[%s219 + $0x158] sm:$0xff]
        %v338 = vld [vmem:[%s219 + $0x160] sm:$0xff]
        %v339 = vld [vmem:[%s219 + $0x168] sm:$0xff]
        %v340 = vld [vmem:[%s219 + $0x170] sm:$0xff]
        %v341 = vld [vmem:[%s219 + $0x178] sm:$0xff]
        %v342 = vld [vmem:[%s219 + $0x180] sm:$0xff]
        %v343 = vld [vmem:[%s219 + $0x188] sm:$0xff]
        %v344 = vld [vmem:[%s219 + $0x190] sm:$0xff]
        %v345 = vld [vmem:[%s219 + $0x198] sm:$0xff]
        %v346 = vld [vmem:[%s219 + $0x1a0] sm:$0xff]
        %v347 = vld [vmem:[%s219 + $0x1a8] sm:$0xff]
        %v348 = vld [vmem:[%s219 + $0x1b0] sm:$0xff]
        %v349 = vld [vmem:[%s219 + $0x1b8] sm:$0xff]
        %v350 = vld [vmem:[%s219 + $0x1c0] sm:$0xff]
        %v351 = vld [vmem:[%s219 + $0x1c8] sm:$0xff]
        %v352 = vld [vmem:[%s219 + $0x1d0] sm:$0xff]
        %v353 = vld [vmem:[%s219 + $0x1d8] sm:$0xff]
        %v354 = vld [vmem:[%s219 + $0x1e0] sm:$0xff]
        %v355 = vld [vmem:[%s219 + $0x1e8] sm:$0xff]
        %v356 = vld [vmem:[%s219 + $0x1f0] sm:$0xff]
        %v357 = vld [vmem:[%s219 + $0x1f8] sm:$0xff]
        %v358 = vld [vmem:[#allocation2] sm:$0xff]
        %v359 = vld [vmem:[#allocation2 + $0x8] sm:$0xff]
        %v360 = vld [vmem:[#allocation2 + $0x10] sm:$0xff]
        %v361 = vld [vmem:[#allocation2 + $0x18] sm:$0xff]
        %v362 = vld [vmem:[#allocation2 + $0x20] sm:$0xff]
        %v363 = vld [vmem:[#allocation2 + $0x28] sm:$0xff]
        %v364 = vld [vmem:[#allocation2 + $0x30] sm:$0xff]
        %v365 = vld [vmem:[#allocation2 + $0x38] sm:$0xff]
        %v366 = vld [vmem:[#allocation2 + $0x40] sm:$0xff]
        %v367 = vld [vmem:[#allocation2 + $0x48] sm:$0xff]
        %v368 = vld [vmem:[#allocation2 + $0x50] sm:$0xff]
        %v369 = vld [vmem:[#allocation2 + $0x58] sm:$0xff]
        %v370 = vld [vmem:[#allocation2 + $0x60] sm:$0xff]
        %v371 = vld [vmem:[#allocation2 + $0x68] sm:$0xff]
        %v372 = vld [vmem:[#allocation2 + $0x70] sm:$0xff]
        %v373 = vld [vmem:[#allocation2 + $0x78] sm:$0xff]
        %v374 = vld [vmem:[#allocation2 + $0x80] sm:$0xff]
        %v375 = vld [vmem:[#allocation2 + $0x88] sm:$0xff]
        %v376 = vld [vmem:[#allocation2 + $0x90] sm:$0xff]
        %v377 = vld [vmem:[#allocation2 + $0x98] sm:$0xff]
        %v378 = vld [vmem:[#allocation2 + $0xa0] sm:$0xff]
        %v379 = vld [vmem:[#allocation2 + $0xa8] sm:$0xff]
        %v380 = vld [vmem:[#allocation2 + $0xb0] sm:$0xff]
        %v381 = vld [vmem:[#allocation2 + $0xb8] sm:$0xff]
        %v382 = vld [vmem:[#allocation2 + $0xc0] sm:$0xff]
        %v383 = vld [vmem:[#allocation2 + $0xc8] sm:$0xff]
        %v384 = vld [vmem:[#allocation2 + $0xd0] sm:$0xff]
        %v385 = vld [vmem:[#allocation2 + $0xd8] sm:$0xff]
        %v386 = vld [vmem:[#allocation2 + $0xe0] sm:$0xff]
        %v387 = vld [vmem:[#allocation2 + $0xe8] sm:$0xff]
        %v388 = vld [vmem:[#allocation2 + $0xf0] sm:$0xff]
        %v389 = vld [vmem:[#allocation2 + $0xf8] sm:$0xff]
        %v390 = vld [vmem:[#allocation2 + $0x100] sm:$0xff]
        %v391 = vld [vmem:[#allocation2 + $0x108] sm:$0xff]
        %v392 = vld [vmem:[#allocation2 + $0x110] sm:$0xff]
        %v393 = vld [vmem:[#allocation2 + $0x118] sm:$0xff]
        %v394 = vld [vmem:[#allocation2 + $0x120] sm:$0xff]
        %v395 = vld [vmem:[#allocation2 + $0x128] sm:$0xff]
        %v396 = vld [vmem:[#allocation2 + $0x130] sm:$0xff]
        %v397 = vld [vmem:[#allocation2 + $0x138] sm:$0xff]
        %v398 = vld [vmem:[#allocation2 + $0x140] sm:$0xff]
        %v399 = vld [vmem:[#allocation2 + $0x148] sm:$0xff]
        %v400 = vld [vmem:[#allocation2 + $0x150] sm:$0xff]
        %v401 = vld [vmem:[#allocation2 + $0x158] sm:$0xff]
        %v402 = vld [vmem:[#allocation2 + $0x160] sm:$0xff]
        %v403 = vld [vmem:[#allocation2 + $0x168] sm:$0xff]
        %v404 = vld [vmem:[#allocation2 + $0x170] sm:$0xff]
        %v405 = vld [vmem:[#allocation2 + $0x178] sm:$0xff]
        %v406 = vld [vmem:[#allocation2 + $0x180] sm:$0xff]
        %v407 = vld [vmem:[#allocation2 + $0x188] sm:$0xff]
        %v408 = vld [vmem:[#allocation2 + $0x190] sm:$0xff]
        %v409 = vld [vmem:[#allocation2 + $0x198] sm:$0xff]
        %v410 = vld [vmem:[#allocation2 + $0x1a0] sm:$0xff]
        %v411 = vld [vmem:[#allocation2 + $0x1a8] sm:$0xff]
        %v412 = vld [vmem:[#allocation2 + $0x1b0] sm:$0xff]
        %v413 = vld [vmem:[#allocation2 + $0x1b8] sm:$0xff]
        %v414 = vld [vmem:[#allocation2 + $0x1c0] sm:$0xff]
        %v415 = vld [vmem:[#allocation2 + $0x1c8] sm:$0xff]
        %v416 = vld [vmem:[#allocation2 + $0x1d0] sm:$0xff]
        %v417 = vld [vmem:[#allocation2 + $0x1d8] sm:$0xff]
        %v418 = vld [vmem:[#allocation2 + $0x1e0] sm:$0xff]
        %v419 = vld [vmem:[#allocation2 + $0x1e8] sm:$0xff]
        %v420 = vld [vmem:[#allocation2 + $0x1f0] sm:$0xff]
        %v421 = vld [vmem:[#allocation2 + $0x1f8] sm:$0xff]
        %v422 = vld [vmem:[#allocation2 + $0x200] sm:$0xff]
        %v423 = vld [vmem:[#allocation2 + $0x208] sm:$0xff]
        %v424 = vld [vmem:[#allocation2 + $0x210] sm:$0xff]
        %v425 = vld [vmem:[#allocation2 + $0x218] sm:$0xff]
        %v426 = vld [vmem:[#allocation2 + $0x220] sm:$0xff]
        %v427 = vld [vmem:[#allocation2 + $0x228] sm:$0xff]
        %v428 = vld [vmem:[#allocation2 + $0x230] sm:$0xff]
        %v429 = vld [vmem:[#allocation2 + $0x238] sm:$0xff]
        %v430 = vld [vmem:[#allocation2 + $0x240] sm:$0xff]
        %v431 = vld [vmem:[#allocation2 + $0x248] sm:$0xff]
        %v432 = vld [vmem:[#allocation2 + $0x250] sm:$0xff]
        %v433 = vld [vmem:[#allocation2 + $0x258] sm:$0xff]
        %v434 = vld [vmem:[#allocation2 + $0x260] sm:$0xff]
        %v435 = vld [vmem:[#allocation2 + $0x268] sm:$0xff]
        %v436 = vld [vmem:[#allocation2 + $0x270] sm:$0xff]
        %v437 = vld [vmem:[#allocation2 + $0x278] sm:$0xff]
        %v438 = vld [vmem:[#allocation2 + $0x280] sm:$0xff]
        %v439 = vld [vmem:[#allocation2 + $0x288] sm:$0xff]
        %v440 = vld [vmem:[#allocation2 + $0x290] sm:$0xff]
        %v441 = vld [vmem:[#allocation2 + $0x298] sm:$0xff]
        %v442 = vld [vmem:[#allocation2 + $0x2a0] sm:$0xff]
        %v443 = vld [vmem:[#allocation2 + $0x2a8] sm:$0xff]
        %v444 = vld [vmem:[#allocation2 + $0x2b0] sm:$0xff]
        %v445 = vld [vmem:[#allocation2 + $0x2b8] sm:$0xff]
        %v446 = vld [vmem:[#allocation2 + $0x2c0] sm:$0xff]
        %v447 = vld [vmem:[#allocation2 + $0x2c8] sm:$0xff]
        %v448 = vld [vmem:[#allocation2 + $0x2d0] sm:$0xff]
        %v449 = vld [vmem:[#allocation2 + $0x2d8] sm:$0xff]
        %v450 = vld [vmem:[#allocation2 + $0x2e0] sm:$0xff]
        %v451 = vld [vmem:[#allocation2 + $0x2e8] sm:$0xff]
        %v452 = vld [vmem:[#allocation2 + $0x2f0] sm:$0xff]
        %v453 = vld [vmem:[#allocation2 + $0x2f8] sm:$0xff]
        %v454 = vld [vmem:[%s198] sm:$0xff]
        %v455 = vld [vmem:[%s198 + $0x8] sm:$0xff]
        %v456 = vld [vmem:[%s198 + $0x10] sm:$0xff]
        %v457 = vld [vmem:[%s198 + $0x18] sm:$0xff]
        %v458 = vld [vmem:[%s198 + $0x20] sm:$0xff]
        %v459 = vld [vmem:[%s198 + $0x28] sm:$0xff]
        %v460 = vld [vmem:[%s198 + $0x30] sm:$0xff]
        %v461 = vld [vmem:[%s198 + $0x38] sm:$0xff]
        %v462 = vld [vmem:[%s198 + $0x40] sm:$0xff]
        %v463 = vld [vmem:[%s198 + $0x48] sm:$0xff]
        %v464 = vld [vmem:[%s198 + $0x50] sm:$0xff]
        %v465 = vld [vmem:[%s198 + $0x58] sm:$0xff]
        %v466 = vld [vmem:[%s198 + $0x60] sm:$0xff]
        %v467 = vld [vmem:[%s198 + $0x68] sm:$0xff]
        %v468 = vld [vmem:[%s198 + $0x70] sm:$0xff]
        %v469 = vld [vmem:[%s198 + $0x78] sm:$0xff]
        %v470 = vld [vmem:[%s198 + $0x80] sm:$0xff]
        %v471 = vld [vmem:[%s198 + $0x88] sm:$0xff]
        %v472 = vld [vmem:[%s198 + $0x90] sm:$0xff]
        %v473 = vld [vmem:[%s198 + $0x98] sm:$0xff]
        %v474 = vld [vmem:[%s198 + $0xa0] sm:$0xff]
        %v475 = vld [vmem:[%s198 + $0xa8] sm:$0xff]
        %v476 = vld [vmem:[%s198 + $0xb0] sm:$0xff]
        %v477 = vld [vmem:[%s198 + $0xb8] sm:$0xff]
        %v478 = vld [vmem:[%s198 + $0xc0] sm:$0xff]
        %v479 = vld [vmem:[%s198 + $0xc8] sm:$0xff]
        %v480 = vld [vmem:[%s198 + $0xd0] sm:$0xff]
        %v481 = vld [vmem:[%s198 + $0xd8] sm:$0xff]
        %v482 = vld [vmem:[%s198 + $0xe0] sm:$0xff]
        %v483 = vld [vmem:[%s198 + $0xe8] sm:$0xff]
        %v484 = vld [vmem:[%s198 + $0xf0] sm:$0xff]
        %v485 = vld [vmem:[%s198 + $0xf8] sm:$0xff]
        %v486 = vld [vmem:[%s198 + $0x100] sm:$0xff]
        %v487 = vld [vmem:[%s198 + $0x108] sm:$0xff]
        %v488 = vld [vmem:[%s198 + $0x110] sm:$0xff]
        %v489 = vld [vmem:[%s198 + $0x118] sm:$0xff]
        %v490 = vld [vmem:[%s198 + $0x120] sm:$0xff]
        %v491 = vld [vmem:[%s198 + $0x128] sm:$0xff]
        %v492 = vld [vmem:[%s198 + $0x130] sm:$0xff]
        %v493 = vld [vmem:[%s198 + $0x138] sm:$0xff]
        %v494 = vld [vmem:[%s198 + $0x140] sm:$0xff]
        %v495 = vld [vmem:[%s198 + $0x148] sm:$0xff]
        %v496 = vld [vmem:[%s198 + $0x150] sm:$0xff]
        %v497 = vld [vmem:[%s198 + $0x158] sm:$0xff]
        %v498 = vld [vmem:[%s198 + $0x160] sm:$0xff]
        %v499 = vld [vmem:[%s198 + $0x168] sm:$0xff]
        %v500 = vld [vmem:[%s198 + $0x170] sm:$0xff]
        %v501 = vld [vmem:[%s198 + $0x178] sm:$0xff]
        %v502 = vld [vmem:[%s198 + $0x180] sm:$0xff]
        %v503 = vld [vmem:[%s198 + $0x188] sm:$0xff]
        %v504 = vld [vmem:[%s198 + $0x190] sm:$0xff]
        %v505 = vld [vmem:[%s198 + $0x198] sm:$0xff]
        %v506 = vld [vmem:[%s198 + $0x1a0] sm:$0xff]
        %v507 = vld [vmem:[%s198 + $0x1a8] sm:$0xff]
        %v508 = vld [vmem:[%s198 + $0x1b0] sm:$0xff]
        %v509 = vld [vmem:[%s198 + $0x1b8] sm:$0xff]
        %v510 = vld [vmem:[%s198 + $0x1c0] sm:$0xff]
        %v511 = vld [vmem:[%s198 + $0x1c8] sm:$0xff]
        %v512 = vld [vmem:[%s198 + $0x1d0] sm:$0xff]
        %v513 = vld [vmem:[%s198 + $0x1d8] sm:$0xff]
        %v514 = vld [vmem:[%s198 + $0x1e0] sm:$0xff]
        %v515 = vld [vmem:[%s198 + $0x1e8] sm:$0xff]
        %v516 = vld [vmem:[%s198 + $0x1f0] sm:$0xff]
        %v517 = vld [vmem:[%s198 + $0x1f8] sm:$0xff]
        %v518 = vld [vmem:[%s198 + $0x200] sm:$0xff]
        %v519 = vld [vmem:[%s198 + $0x208] sm:$0xff]
        %v520 = vld [vmem:[%s198 + $0x210] sm:$0xff]
        %v521 = vld [vmem:[%s198 + $0x218] sm:$0xff]
        %v522 = vld [vmem:[%s198 + $0x220] sm:$0xff]
        %v523 = vld [vmem:[%s198 + $0x228] sm:$0xff]
        %v524 = vld [vmem:[%s198 + $0x230] sm:$0xff]
        %v525 = vld [vmem:[%s198 + $0x238] sm:$0xff]
        %v526 = vld [vmem:[%s198 + $0x240] sm:$0xff]
        %v527 = vld [vmem:[%s198 + $0x248] sm:$0xff]
        %v528 = vld [vmem:[%s198 + $0x250] sm:$0xff]
        %v529 = vld [vmem:[%s198 + $0x258] sm:$0xff]
        %v530 = vld [vmem:[%s198 + $0x260] sm:$0xff]
        %v531 = vld [vmem:[%s198 + $0x268] sm:$0xff]
        %v532 = vld [vmem:[%s198 + $0x270] sm:$0xff]
        %v533 = vld [vmem:[%s198 + $0x278] sm:$0xff]
        %v534 = vld [vmem:[%s198 + $0x280] sm:$0xff]
        %v535 = vld [vmem:[%s198 + $0x288] sm:$0xff]
        %v536 = vld [vmem:[%s198 + $0x290] sm:$0xff]
        %v537 = vld [vmem:[%s198 + $0x298] sm:$0xff]
        %v538 = vld [vmem:[%s198 + $0x2a0] sm:$0xff]
        %v539 = vld [vmem:[%s198 + $0x2a8] sm:$0xff]
        %v540 = vld [vmem:[%s198 + $0x2b0] sm:$0xff]
        %v541 = vld [vmem:[%s198 + $0x2b8] sm:$0xff]
        %v542 = vld [vmem:[%s198 + $0x2c0] sm:$0xff]
        %v543 = vld [vmem:[%s198 + $0x2c8] sm:$0xff]
        %v544 = vld [vmem:[%s198 + $0x2d0] sm:$0xff]
        %v545 = vld [vmem:[%s198 + $0x2d8] sm:$0xff]
        %v546 = vld [vmem:[%s198 + $0x2e0] sm:$0xff]
        %v547 = vld [vmem:[%s198 + $0x2e8] sm:$0xff]
        %v548 = vld [vmem:[%s198 + $0x2f0] sm:$0xff]
        %v549 = vld [vmem:[%s198 + $0x2f8] sm:$0xff]
        %550 = vmatpush.msra.mxu0 %v484
        %551 = vmatpush.msra.mxu0 %v482
        %552 = vmatpush.msra.mxu0 %v480
        %553 = vmatpush.msra.mxu0 %v478
        %554 = vmatpush.msra.mxu0 %v476
        %555 = vmatpush.msra.mxu0 %v474
        %556 = vmatpush.msra.mxu0 %v472
        %557 = vmatpush.msra.mxu0 %v470
        %558 = vmatpush.msra.mxu0 %v468
        %559 = vmatpush.msra.mxu0 %v466
        %560 = vmatpush.msra.mxu0 %v464
        %561 = vmatpush.msra.mxu0 %v462
        %562 = vmatpush.msra.mxu0 %v460
        %563 = vmatpush.msra.mxu0 %v458
        %564 = vmatpush.msra.mxu0 %v456
        %565 = vmatpush.msra.mxu0 %v454
        %566 = vmatmul.f32.gmra.mxu0 %v358
        %v567 = vpop.f32.mrf.mxu0
        %v568 = vadd.f32 0.0, %v567
        %569 = vmatmul.f32.gmra.mxu0 %v361
        %v570 = vpop.f32.mrf.mxu0
        %v571 = vadd.f32 0.0, %v570
        %572 = vmatmul.f32.gmra.mxu0 %v364
        %v573 = vpop.f32.mrf.mxu0
        %v574 = vadd.f32 0.0, %v573
        %575 = vmatmul.f32.gmra.mxu0 %v367
        %v576 = vpop.f32.mrf.mxu0
        %v577 = vadd.f32 0.0, %v576
        %578 = vmatmul.f32.gmra.mxu0 %v370
        %v579 = vpop.f32.mrf.mxu0
        %v580 = vadd.f32 0.0, %v579
        %581 = vmatmul.f32.gmra.mxu0 %v373
        %v582 = vpop.f32.mrf.mxu0
        %v583 = vadd.f32 0.0, %v582
        %584 = vmatmul.f32.gmra.mxu0 %v376
        %v585 = vpop.f32.mrf.mxu0
        %v586 = vadd.f32 0.0, %v585
        %587 = vmatmul.f32.gmra.mxu0 %v379
        %v588 = vpop.f32.mrf.mxu0
        %v589 = vadd.f32 0.0, %v588
        %590 = vmatmul.f32.gmra.mxu0 %v382
        %v591 = vpop.f32.mrf.mxu0
        %v592 = vadd.f32 0.0, %v591
        %593 = vmatmul.f32.gmra.mxu0 %v385
        %v594 = vpop.f32.mrf.mxu0
        %v595 = vadd.f32 0.0, %v594
        %596 = vmatmul.f32.gmra.mxu0 %v388
        %v597 = vpop.f32.mrf.mxu0
        %v598 = vadd.f32 0.0, %v597
        %599 = vmatmul.f32.gmra.mxu0 %v391
        %v600 = vpop.f32.mrf.mxu0
        %v601 = vadd.f32 0.0, %v600
        %602 = vmatmul.f32.gmra.mxu0 %v394
        %v603 = vpop.f32.mrf.mxu0
        %v604 = vadd.f32 0.0, %v603
        %605 = vmatmul.f32.gmra.mxu0 %v397
        %v606 = vpop.f32.mrf.mxu0
        %v607 = vadd.f32 0.0, %v606
        %608 = vmatmul.f32.gmra.mxu0 %v400
        %v609 = vpop.f32.mrf.mxu0
        %v610 = vadd.f32 0.0, %v609
        %611 = vmatmul.f32.gmra.mxu0 %v403
        %v612 = vpop.f32.mrf.mxu0
        %v613 = vadd.f32 0.0, %v612
        %614 = vmatmul.f32.gmra.mxu0 %v406
        %v615 = vpop.f32.mrf.mxu0
        %v616 = vadd.f32 0.0, %v615
        %617 = vmatmul.f32.gmra.mxu0 %v409
        %v618 = vpop.f32.mrf.mxu0
        %v619 = vadd.f32 0.0, %v618
        %620 = vmatmul.f32.gmra.mxu0 %v412
        %v621 = vpop.f32.mrf.mxu0
        %v622 = vadd.f32 0.0, %v621
        %623 = vmatmul.f32.gmra.mxu0 %v415
        %v624 = vpop.f32.mrf.mxu0
        %v625 = vadd.f32 0.0, %v624
        %626 = vmatmul.f32.gmra.mxu0 %v418
        %v627 = vpop.f32.mrf.mxu0
        %v628 = vadd.f32 0.0, %v627
        %629 = vmatmul.f32.gmra.mxu0 %v421
        %v630 = vpop.f32.mrf.mxu0
        %v631 = vadd.f32 0.0, %v630
        %632 = vmatmul.f32.gmra.mxu0 %v424
        %v633 = vpop.f32.mrf.mxu0
        %v634 = vadd.f32 0.0, %v633
        %635 = vmatmul.f32.gmra.mxu0 %v427
        %v636 = vpop.f32.mrf.mxu0
        %v637 = vadd.f32 0.0, %v636
        %638 = vmatmul.f32.gmra.mxu0 %v430
        %v639 = vpop.f32.mrf.mxu0
        %v640 = vadd.f32 0.0, %v639
        %641 = vmatmul.f32.gmra.mxu0 %v433
        %v642 = vpop.f32.mrf.mxu0
        %v643 = vadd.f32 0.0, %v642
        %644 = vmatmul.f32.gmra.mxu0 %v436
        %v645 = vpop.f32.mrf.mxu0
        %v646 = vadd.f32 0.0, %v645
        %647 = vmatmul.f32.gmra.mxu0 %v439
        %v648 = vpop.f32.mrf.mxu0
        %v649 = vadd.f32 0.0, %v648
        %650 = vmatmul.f32.gmra.mxu0 %v442
        %v651 = vpop.f32.mrf.mxu0
        %v652 = vadd.f32 0.0, %v651
        %653 = vmatmul.f32.gmra.mxu0 %v445
        %v654 = vpop.f32.mrf.mxu0
        %v655 = vadd.f32 0.0, %v654
        %656 = vmatmul.f32.gmra.mxu0 %v448
        %v657 = vpop.f32.mrf.mxu0
        %v658 = vadd.f32 0.0, %v657
        %659 = vmatmul.f32.gmra.mxu0 %v451
        %v660 = vpop.f32.mrf.mxu0
        %v661 = vadd.f32 0.0, %v660
        %662 = vdwg.mxu0
        %663 = vmatpush.msra.mxu0 %v516
        %664 = vmatpush.msra.mxu0 %v514
        %665 = vmatpush.msra.mxu0 %v512
        %666 = vmatpush.msra.mxu0 %v510
        %667 = vmatpush.msra.mxu0 %v508
        %668 = vmatpush.msra.mxu0 %v506
        %669 = vmatpush.msra.mxu0 %v504
        %670 = vmatpush.msra.mxu0 %v502
        %671 = vmatpush.msra.mxu0 %v500
        %672 = vmatpush.msra.mxu0 %v498
        %673 = vmatpush.msra.mxu0 %v496
        %674 = vmatpush.msra.mxu0 %v494
        %675 = vmatpush.msra.mxu0 %v492
        %676 = vmatpush.msra.mxu0 %v490
        %677 = vmatpush.msra.mxu0 %v488
        %678 = vmatpush.msra.mxu0 %v486
        %679 = vmatmul.f32.gmra.mxu0 %v359
        %v680 = vpop.f32.mrf.mxu0
        %v681 = vadd.f32 %v568, %v680
        %682 = vmatmul.f32.gmra.mxu0 %v362
        %v683 = vpop.f32.mrf.mxu0
        %v684 = vadd.f32 %v571, %v683
        %685 = vmatmul.f32.gmra.mxu0 %v365
        %v686 = vpop.f32.mrf.mxu0
        %v687 = vadd.f32 %v574, %v686
        %688 = vmatmul.f32.gmra.mxu0 %v368
        %v689 = vpop.f32.mrf.mxu0
        %v690 = vadd.f32 %v577, %v689
        %691 = vmatmul.f32.gmra.mxu0 %v371
        %v692 = vpop.f32.mrf.mxu0
        %v693 = vadd.f32 %v580, %v692
        %694 = vmatmul.f32.gmra.mxu0 %v374
        %v695 = vpop.f32.mrf.mxu0
        %v696 = vadd.f32 %v583, %v695
        %697 = vmatmul.f32.gmra.mxu0 %v377
        %v698 = vpop.f32.mrf.mxu0
        %v699 = vadd.f32 %v586, %v698
        %700 = vmatmul.f32.gmra.mxu0 %v380
        %v701 = vpop.f32.mrf.mxu0
        %v702 = vadd.f32 %v589, %v701
        %703 = vmatmul.f32.gmra.mxu0 %v383
        %v704 = vpop.f32.mrf.mxu0
        %v705 = vadd.f32 %v592, %v704
        %706 = vmatmul.f32.gmra.mxu0 %v386
        %v707 = vpop.f32.mrf.mxu0
        %v708 = vadd.f32 %v595, %v707
        %709 = vmatmul.f32.gmra.mxu0 %v389
        %v710 = vpop.f32.mrf.mxu0
        %v711 = vadd.f32 %v598, %v710
        %712 = vmatmul.f32.gmra.mxu0 %v392
        %v713 = vpop.f32.mrf.mxu0
        %v714 = vadd.f32 %v601, %v713
        %715 = vmatmul.f32.gmra.mxu0 %v395
        %v716 = vpop.f32.mrf.mxu0
        %v717 = vadd.f32 %v604, %v716
        %718 = vmatmul.f32.gmra.mxu0 %v398
        %v719 = vpop.f32.mrf.mxu0
        %v720 = vadd.f32 %v607, %v719
        %721 = vmatmul.f32.gmra.mxu0 %v401
        %v722 = vpop.f32.mrf.mxu0
        %v723 = vadd.f32 %v610, %v722
        %724 = vmatmul.f32.gmra.mxu0 %v404
        %v725 = vpop.f32.mrf.mxu0
        %v726 = vadd.f32 %v613, %v725
        %727 = vmatmul.f32.gmra.mxu0 %v407
        %v728 = vpop.f32.mrf.mxu0
        %v729 = vadd.f32 %v616, %v728
        %730 = vmatmul.f32.gmra.mxu0 %v410
        %v731 = vpop.f32.mrf.mxu0
        %v732 = vadd.f32 %v619, %v731
        %733 = vmatmul.f32.gmra.mxu0 %v413
        %v734 = vpop.f32.mrf.mxu0
        %v735 = vadd.f32 %v622, %v734
        %736 = vmatmul.f32.gmra.mxu0 %v416
        %v737 = vpop.f32.mrf.mxu0
        %v738 = vadd.f32 %v625, %v737
        %739 = vmatmul.f32.gmra.mxu0 %v419
        %v740 = vpop.f32.mrf.mxu0
        %v741 = vadd.f32 %v628, %v740
        %742 = vmatmul.f32.gmra.mxu0 %v422
        %v743 = vpop.f32.mrf.mxu0
        %v744 = vadd.f32 %v631, %v743
        %745 = vmatmul.f32.gmra.mxu0 %v425
        %v746 = vpop.f32.mrf.mxu0
        %v747 = vadd.f32 %v634, %v746
        %748 = vmatmul.f32.gmra.mxu0 %v428
        %v749 = vpop.f32.mrf.mxu0
        %v750 = vadd.f32 %v637, %v749
        %751 = vmatmul.f32.gmra.mxu0 %v431
        %v752 = vpop.f32.mrf.mxu0
        %v753 = vadd.f32 %v640, %v752
        %754 = vmatmul.f32.gmra.mxu0 %v434
        %v755 = vpop.f32.mrf.mxu0
        %v756 = vadd.f32 %v643, %v755
        %757 = vmatmul.f32.gmra.mxu0 %v437
        %v758 = vpop.f32.mrf.mxu0
        %v759 = vadd.f32 %v646, %v758
        %760 = vmatmul.f32.gmra.mxu0 %v440
        %v761 = vpop.f32.mrf.mxu0
        %v762 = vadd.f32 %v649, %v761
        %763 = vmatmul.f32.gmra.mxu0 %v443
        %v764 = vpop.f32.mrf.mxu0
        %v765 = vadd.f32 %v652, %v764
        %766 = vmatmul.f32.gmra.mxu0 %v446
        %v767 = vpop.f32.mrf.mxu0
        %v768 = vadd.f32 %v655, %v767
        %769 = vmatmul.f32.gmra.mxu0 %v449
        %v770 = vpop.f32.mrf.mxu0
        %v771 = vadd.f32 %v658, %v770
        %772 = vmatmul.f32.gmra.mxu0 %v452
        %v773 = vpop.f32.mrf.mxu0
        %v774 = vadd.f32 %v661, %v773
        %775 = vdwg.mxu0
        %776 = vmatpush.msra.mxu0 %v548
        %777 = vmatpush.msra.mxu0 %v546
        %778 = vmatpush.msra.mxu0 %v544
        %779 = vmatpush.msra.mxu0 %v542
        %780 = vmatpush.msra.mxu0 %v540
        %781 = vmatpush.msra.mxu0 %v538
        %782 = vmatpush.msra.mxu0 %v536
        %783 = vmatpush.msra.mxu0 %v534
        %784 = vmatpush.msra.mxu0 %v532
        %785 = vmatpush.msra.mxu0 %v530
        %786 = vmatpush.msra.mxu0 %v528
        %787 = vmatpush.msra.mxu0 %v526
        %788 = vmatpush.msra.mxu0 %v524
        %789 = vmatpush.msra.mxu0 %v522
        %790 = vmatpush.msra.mxu0 %v520
        %791 = vmatpush.msra.mxu0 %v518
        %792 = vmatmul.f32.gmra.mxu0 %v360
        %v793 = vpop.f32.mrf.mxu0
        %v794 = vadd.f32 %v681, %v793
        %795 = vmatmul.f32.gmra.mxu0 %v363
        %v796 = vpop.f32.mrf.mxu0
        %v797 = vadd.f32 %v684, %v796
        %798 = vmatmul.f32.gmra.mxu0 %v366
        %v799 = vpop.f32.mrf.mxu0
        %v800 = vadd.f32 %v687, %v799
        %801 = vmatmul.f32.gmra.mxu0 %v369
        %v802 = vpop.f32.mrf.mxu0
        %v803 = vadd.f32 %v690, %v802
        %804 = vmatmul.f32.gmra.mxu0 %v372
        %v805 = vpop.f32.mrf.mxu0
        %v806 = vadd.f32 %v693, %v805
        %807 = vmatmul.f32.gmra.mxu0 %v375
        %v808 = vpop.f32.mrf.mxu0
        %v809 = vadd.f32 %v696, %v808
        %810 = vmatmul.f32.gmra.mxu0 %v378
        %v811 = vpop.f32.mrf.mxu0
        %v812 = vadd.f32 %v699, %v811
        %813 = vmatmul.f32.gmra.mxu0 %v381
        %v814 = vpop.f32.mrf.mxu0
        %v815 = vadd.f32 %v702, %v814
        %816 = vmatmul.f32.gmra.mxu0 %v384
        %v817 = vpop.f32.mrf.mxu0
        %v818 = vadd.f32 %v705, %v817
        %819 = vmatmul.f32.gmra.mxu0 %v387
        %v820 = vpop.f32.mrf.mxu0
        %v821 = vadd.f32 %v708, %v820
        %822 = vmatmul.f32.gmra.mxu0 %v390
        %v823 = vpop.f32.mrf.mxu0
        %v824 = vadd.f32 %v711, %v823
        %825 = vmatmul.f32.gmra.mxu0 %v393
        %v826 = vpop.f32.mrf.mxu0
        %v827 = vadd.f32 %v714, %v826
        %828 = vmatmul.f32.gmra.mxu0 %v396
        %v829 = vpop.f32.mrf.mxu0
        %v830 = vadd.f32 %v717, %v829
        %831 = vmatmul.f32.gmra.mxu0 %v399
        %v832 = vpop.f32.mrf.mxu0
        %v833 = vadd.f32 %v720, %v832
        %834 = vmatmul.f32.gmra.mxu0 %v402
        %v835 = vpop.f32.mrf.mxu0
        %v836 = vadd.f32 %v723, %v835
        %837 = vmatmul.f32.gmra.mxu0 %v405
        %v838 = vpop.f32.mrf.mxu0
        %v839 = vadd.f32 %v726, %v838
        %840 = vmatmul.f32.gmra.mxu0 %v408
        %v841 = vpop.f32.mrf.mxu0
        %v842 = vadd.f32 %v729, %v841
        %843 = vmatmul.f32.gmra.mxu0 %v411
        %v844 = vpop.f32.mrf.mxu0
        %v845 = vadd.f32 %v732, %v844
        %846 = vmatmul.f32.gmra.mxu0 %v414
        %v847 = vpop.f32.mrf.mxu0
        %v848 = vadd.f32 %v735, %v847
        %849 = vmatmul.f32.gmra.mxu0 %v417
        %v850 = vpop.f32.mrf.mxu0
        %v851 = vadd.f32 %v738, %v850
        %852 = vmatmul.f32.gmra.mxu0 %v420
        %v853 = vpop.f32.mrf.mxu0
        %v854 = vadd.f32 %v741, %v853
        %855 = vmatmul.f32.gmra.mxu0 %v423
        %v856 = vpop.f32.mrf.mxu0
        %v857 = vadd.f32 %v744, %v856
        %858 = vmatmul.f32.gmra.mxu0 %v426
        %v859 = vpop.f32.mrf.mxu0
        %v860 = vadd.f32 %v747, %v859
        %861 = vmatmul.f32.gmra.mxu0 %v429
        %v862 = vpop.f32.mrf.mxu0
        %v863 = vadd.f32 %v750, %v862
        %864 = vmatmul.f32.gmra.mxu0 %v432
        %v865 = vpop.f32.mrf.mxu0
        %v866 = vadd.f32 %v753, %v865
        %867 = vmatmul.f32.gmra.mxu0 %v435
        %v868 = vpop.f32.mrf.mxu0
        %v869 = vadd.f32 %v756, %v868
        %870 = vmatmul.f32.gmra.mxu0 %v438
        %v871 = vpop.f32.mrf.mxu0
        %v872 = vadd.f32 %v759, %v871
        %873 = vmatmul.f32.gmra.mxu0 %v441
        %v874 = vpop.f32.mrf.mxu0
        %v875 = vadd.f32 %v762, %v874
        %876 = vmatmul.f32.gmra.mxu0 %v444
        %v877 = vpop.f32.mrf.mxu0
        %v878 = vadd.f32 %v765, %v877
        %879 = vmatmul.f32.gmra.mxu0 %v447
        %v880 = vpop.f32.mrf.mxu0
        %v881 = vadd.f32 %v768, %v880
        %882 = vmatmul.f32.gmra.mxu0 %v450
        %v883 = vpop.f32.mrf.mxu0
        %v884 = vadd.f32 %v771, %v883
        %885 = vmatmul.f32.gmra.mxu0 %v453
        %v886 = vpop.f32.mrf.mxu0
        %v887 = vadd.f32 %v774, %v886
        %888 = vdwg.mxu0
        %889 = vmatpush.msra.mxu0 %v485
        %890 = vmatpush.msra.mxu0 %v483
        %891 = vmatpush.msra.mxu0 %v481
        %892 = vmatpush.msra.mxu0 %v479
        %893 = vmatpush.msra.mxu0 %v477
        %894 = vmatpush.msra.mxu0 %v475
        %895 = vmatpush.msra.mxu0 %v473
        %896 = vmatpush.msra.mxu0 %v471
        %897 = vmatpush.msra.mxu0 %v469
        %898 = vmatpush.msra.mxu0 %v467
        %899 = vmatpush.msra.mxu0 %v465
        %900 = vmatpush.msra.mxu0 %v463
        %901 = vmatpush.msra.mxu0 %v461
        %902 = vmatpush.msra.mxu0 %v459
        %903 = vmatpush.msra.mxu0 %v457
        %904 = vmatpush.msra.mxu0 %v455
        %905 = vmatmul.f32.gmra.mxu0 %v358
        %v906 = vpop.f32.mrf.mxu0
        %v907 = vadd.f32 0.0, %v906
        %908 = vmatmul.f32.gmra.mxu0 %v361
        %v909 = vpop.f32.mrf.mxu0
        %v910 = vadd.f32 0.0, %v909
        %911 = vmatmul.f32.gmra.mxu0 %v364
        %v912 = vpop.f32.mrf.mxu0
        %v913 = vadd.f32 0.0, %v912
        %914 = vmatmul.f32.gmra.mxu0 %v367
        %v915 = vpop.f32.mrf.mxu0
        %v916 = vadd.f32 0.0, %v915
        %917 = vmatmul.f32.gmra.mxu0 %v370
        %v918 = vpop.f32.mrf.mxu0
        %v919 = vadd.f32 0.0, %v918
        %920 = vmatmul.f32.gmra.mxu0 %v373
        %v921 = vpop.f32.mrf.mxu0
        %v922 = vadd.f32 0.0, %v921
        %923 = vmatmul.f32.gmra.mxu0 %v376
        %v924 = vpop.f32.mrf.mxu0
        %v925 = vadd.f32 0.0, %v924
        %926 = vmatmul.f32.gmra.mxu0 %v379
        %v927 = vpop.f32.mrf.mxu0
        %v928 = vadd.f32 0.0, %v927
        %929 = vmatmul.f32.gmra.mxu0 %v382
        %v930 = vpop.f32.mrf.mxu0
        %v931 = vadd.f32 0.0, %v930
        %932 = vmatmul.f32.gmra.mxu0 %v385
        %v933 = vpop.f32.mrf.mxu0
        %v934 = vadd.f32 0.0, %v933
        %935 = vmatmul.f32.gmra.mxu0 %v388
        %v936 = vpop.f32.mrf.mxu0
        %v937 = vadd.f32 0.0, %v936
        %938 = vmatmul.f32.gmra.mxu0 %v391
        %v939 = vpop.f32.mrf.mxu0
        %v940 = vadd.f32 0.0, %v939
        %941 = vmatmul.f32.gmra.mxu0 %v394
        %v942 = vpop.f32.mrf.mxu0
        %v943 = vadd.f32 0.0, %v942
        %944 = vmatmul.f32.gmra.mxu0 %v397
        %v945 = vpop.f32.mrf.mxu0
        %v946 = vadd.f32 0.0, %v945
        %947 = vmatmul.f32.gmra.mxu0 %v400
        %v948 = vpop.f32.mrf.mxu0
        %v949 = vadd.f32 0.0, %v948
        %950 = vmatmul.f32.gmra.mxu0 %v403
        %v951 = vpop.f32.mrf.mxu0
        %v952 = vadd.f32 0.0, %v951
        %953 = vmatmul.f32.gmra.mxu0 %v406
        %v954 = vpop.f32.mrf.mxu0
        %v955 = vadd.f32 0.0, %v954
        %956 = vmatmul.f32.gmra.mxu0 %v409
        %v957 = vpop.f32.mrf.mxu0
        %v958 = vadd.f32 0.0, %v957
        %959 = vmatmul.f32.gmra.mxu0 %v412
        %v960 = vpop.f32.mrf.mxu0
        %v961 = vadd.f32 0.0, %v960
        %962 = vmatmul.f32.gmra.mxu0 %v415
        %v963 = vpop.f32.mrf.mxu0
        %v964 = vadd.f32 0.0, %v963
        %965 = vmatmul.f32.gmra.mxu0 %v418
        %v966 = vpop.f32.mrf.mxu0
        %v967 = vadd.f32 0.0, %v966
        %968 = vmatmul.f32.gmra.mxu0 %v421
        %v969 = vpop.f32.mrf.mxu0
        %v970 = vadd.f32 0.0, %v969
        %971 = vmatmul.f32.gmra.mxu0 %v424
        %v972 = vpop.f32.mrf.mxu0
        %v973 = vadd.f32 0.0, %v972
        %974 = vmatmul.f32.gmra.mxu0 %v427
        %v975 = vpop.f32.mrf.mxu0
        %v976 = vadd.f32 0.0, %v975
        %977 = vmatmul.f32.gmra.mxu0 %v430
        %v978 = vpop.f32.mrf.mxu0
        %v979 = vadd.f32 0.0, %v978
        %980 = vmatmul.f32.gmra.mxu0 %v433
        %v981 = vpop.f32.mrf.mxu0
        %v982 = vadd.f32 0.0, %v981
        %983 = vmatmul.f32.gmra.mxu0 %v436
        %v984 = vpop.f32.mrf.mxu0
        %v985 = vadd.f32 0.0, %v984
        %986 = vmatmul.f32.gmra.mxu0 %v439
        %v987 = vpop.f32.mrf.mxu0
        %v988 = vadd.f32 0.0, %v987
        %989 = vmatmul.f32.gmra.mxu0 %v442
        %v990 = vpop.f32.mrf.mxu0
        %v991 = vadd.f32 0.0, %v990
        %992 = vmatmul.f32.gmra.mxu0 %v445
        %v993 = vpop.f32.mrf.mxu0
        %v994 = vadd.f32 0.0, %v993
        %995 = vmatmul.f32.gmra.mxu0 %v448
        %v996 = vpop.f32.mrf.mxu0
        %v997 = vadd.f32 0.0, %v996
        %998 = vmatmul.f32.gmra.mxu0 %v451
        %v999 = vpop.f32.mrf.mxu0
        %v1000 = vadd.f32 0.0, %v999
        %1001 = vdwg.mxu0
        %1002 = vmatpush.msra.mxu0 %v517
        %1003 = vmatpush.msra.mxu0 %v515
        %1004 = vmatpush.msra.mxu0 %v513
        %1005 = vmatpush.msra.mxu0 %v511
        %1006 = vmatpush.msra.mxu0 %v509
        %1007 = vmatpush.msra.mxu0 %v507
        %1008 = vmatpush.msra.mxu0 %v505
        %1009 = vmatpush.msra.mxu0 %v503
        %1010 = vmatpush.msra.mxu0 %v501
        %1011 = vmatpush.msra.mxu0 %v499
        %1012 = vmatpush.msra.mxu0 %v497
        %1013 = vmatpush.msra.mxu0 %v495
        %1014 = vmatpush.msra.mxu0 %v493
        %1015 = vmatpush.msra.mxu0 %v491
        %1016 = vmatpush.msra.mxu0 %v489
        %1017 = vmatpush.msra.mxu0 %v487
        %1018 = vmatmul.f32.gmra.mxu0 %v359
        %v1019 = vpop.f32.mrf.mxu0
        %v1020 = vadd.f32 %v907, %v1019
        %1021 = vmatmul.f32.gmra.mxu0 %v362
        %v1022 = vpop.f32.mrf.mxu0
        %v1023 = vadd.f32 %v910, %v1022
        %1024 = vmatmul.f32.gmra.mxu0 %v365
        %v1025 = vpop.f32.mrf.mxu0
        %v1026 = vadd.f32 %v913, %v1025
        %1027 = vmatmul.f32.gmra.mxu0 %v368
        %v1028 = vpop.f32.mrf.mxu0
        %v1029 = vadd.f32 %v916, %v1028
        %1030 = vmatmul.f32.gmra.mxu0 %v371
        %v1031 = vpop.f32.mrf.mxu0
        %v1032 = vadd.f32 %v919, %v1031
        %1033 = vmatmul.f32.gmra.mxu0 %v374
        %v1034 = vpop.f32.mrf.mxu0
        %v1035 = vadd.f32 %v922, %v1034
        %1036 = vmatmul.f32.gmra.mxu0 %v377
        %v1037 = vpop.f32.mrf.mxu0
        %v1038 = vadd.f32 %v925, %v1037
        %1039 = vmatmul.f32.gmra.mxu0 %v380
        %v1040 = vpop.f32.mrf.mxu0
        %v1041 = vadd.f32 %v928, %v1040
        %1042 = vmatmul.f32.gmra.mxu0 %v383
        %v1043 = vpop.f32.mrf.mxu0
        %v1044 = vadd.f32 %v931, %v1043
        %1045 = vmatmul.f32.gmra.mxu0 %v386
        %v1046 = vpop.f32.mrf.mxu0
        %v1047 = vadd.f32 %v934, %v1046
        %1048 = vmatmul.f32.gmra.mxu0 %v389
        %v1049 = vpop.f32.mrf.mxu0
        %v1050 = vadd.f32 %v937, %v1049
        %1051 = vmatmul.f32.gmra.mxu0 %v392
        %v1052 = vpop.f32.mrf.mxu0
        %v1053 = vadd.f32 %v940, %v1052
        %1054 = vmatmul.f32.gmra.mxu0 %v395
        %v1055 = vpop.f32.mrf.mxu0
        %v1056 = vadd.f32 %v943, %v1055
        %1057 = vmatmul.f32.gmra.mxu0 %v398
        %v1058 = vpop.f32.mrf.mxu0
        %v1059 = vadd.f32 %v946, %v1058
        %1060 = vmatmul.f32.gmra.mxu0 %v401
        %v1061 = vpop.f32.mrf.mxu0
        %v1062 = vadd.f32 %v949, %v1061
        %1063 = vmatmul.f32.gmra.mxu0 %v404
        %v1064 = vpop.f32.mrf.mxu0
        %v1065 = vadd.f32 %v952, %v1064
        %1066 = vmatmul.f32.gmra.mxu0 %v407
        %v1067 = vpop.f32.mrf.mxu0
        %v1068 = vadd.f32 %v955, %v1067
        %1069 = vmatmul.f32.gmra.mxu0 %v410
        %v1070 = vpop.f32.mrf.mxu0
        %v1071 = vadd.f32 %v958, %v1070
        %1072 = vmatmul.f32.gmra.mxu0 %v413
        %v1073 = vpop.f32.mrf.mxu0
        %v1074 = vadd.f32 %v961, %v1073
        %1075 = vmatmul.f32.gmra.mxu0 %v416
        %v1076 = vpop.f32.mrf.mxu0
        %v1077 = vadd.f32 %v964, %v1076
        %1078 = vmatmul.f32.gmra.mxu0 %v419
        %v1079 = vpop.f32.mrf.mxu0
        %v1080 = vadd.f32 %v967, %v1079
        %1081 = vmatmul.f32.gmra.mxu0 %v422
        %v1082 = vpop.f32.mrf.mxu0
        %v1083 = vadd.f32 %v970, %v1082
        %1084 = vmatmul.f32.gmra.mxu0 %v425
        %v1085 = vpop.f32.mrf.mxu0
        %v1086 = vadd.f32 %v973, %v1085
        %1087 = vmatmul.f32.gmra.mxu0 %v428
        %v1088 = vpop.f32.mrf.mxu0
        %v1089 = vadd.f32 %v976, %v1088
        %1090 = vmatmul.f32.gmra.mxu0 %v431
        %v1091 = vpop.f32.mrf.mxu0
        %v1092 = vadd.f32 %v979, %v1091
        %1093 = vmatmul.f32.gmra.mxu0 %v434
        %v1094 = vpop.f32.mrf.mxu0
        %v1095 = vadd.f32 %v982, %v1094
        %1096 = vmatmul.f32.gmra.mxu0 %v437
        %v1097 = vpop.f32.mrf.mxu0
        %v1098 = vadd.f32 %v985, %v1097
        %1099 = vmatmul.f32.gmra.mxu0 %v440
        %v1100 = vpop.f32.mrf.mxu0
        %v1101 = vadd.f32 %v988, %v1100
        %1102 = vmatmul.f32.gmra.mxu0 %v443
        %v1103 = vpop.f32.mrf.mxu0
        %v1104 = vadd.f32 %v991, %v1103
        %1105 = vmatmul.f32.gmra.mxu0 %v446
        %v1106 = vpop.f32.mrf.mxu0
        %v1107 = vadd.f32 %v994, %v1106
        %1108 = vmatmul.f32.gmra.mxu0 %v449
        %v1109 = vpop.f32.mrf.mxu0
        %v1110 = vadd.f32 %v997, %v1109
        %1111 = vmatmul.f32.gmra.mxu0 %v452
        %v1112 = vpop.f32.mrf.mxu0
        %v1113 = vadd.f32 %v1000, %v1112
        %1114 = vdwg.mxu0
        %1115 = vmatpush.msra.mxu0 %v549
        %1116 = vmatpush.msra.mxu0 %v547
        %1117 = vmatpush.msra.mxu0 %v545
        %1118 = vmatpush.msra.mxu0 %v543
        %1119 = vmatpush.msra.mxu0 %v541
        %1120 = vmatpush.msra.mxu0 %v539
        %1121 = vmatpush.msra.mxu0 %v537
        %1122 = vmatpush.msra.mxu0 %v535
        %1123 = vmatpush.msra.mxu0 %v533
        %1124 = vmatpush.msra.mxu0 %v531
        %1125 = vmatpush.msra.mxu0 %v529
        %1126 = vmatpush.msra.mxu0 %v527
        %1127 = vmatpush.msra.mxu0 %v525
        %1128 = vmatpush.msra.mxu0 %v523
        %1129 = vmatpush.msra.mxu0 %v521
        %1130 = vmatpush.msra.mxu0 %v519
        %1131 = vmatmul.f32.gmra.mxu0 %v360
        %v1132 = vpop.f32.mrf.mxu0
        %v1133 = vadd.f32 %v1020, %v1132
        %1134 = vmatmul.f32.gmra.mxu0 %v363
        %v1135 = vpop.f32.mrf.mxu0
        %v1136 = vadd.f32 %v1023, %v1135
        %1137 = vmatmul.f32.gmra.mxu0 %v366
        %v1138 = vpop.f32.mrf.mxu0
        %v1139 = vadd.f32 %v1026, %v1138
        %1140 = vmatmul.f32.gmra.mxu0 %v369
        %v1141 = vpop.f32.mrf.mxu0
        %v1142 = vadd.f32 %v1029, %v1141
        %1143 = vmatmul.f32.gmra.mxu0 %v372
        %v1144 = vpop.f32.mrf.mxu0
        %v1145 = vadd.f32 %v1032, %v1144
        %1146 = vmatmul.f32.gmra.mxu0 %v375
        %v1147 = vpop.f32.mrf.mxu0
        %v1148 = vadd.f32 %v1035, %v1147
        %1149 = vmatmul.f32.gmra.mxu0 %v378
        %v1150 = vpop.f32.mrf.mxu0
        %v1151 = vadd.f32 %v1038, %v1150
        %1152 = vmatmul.f32.gmra.mxu0 %v381
        %v1153 = vpop.f32.mrf.mxu0
        %v1154 = vadd.f32 %v1041, %v1153
        %1155 = vmatmul.f32.gmra.mxu0 %v384
        %v1156 = vpop.f32.mrf.mxu0
        %v1157 = vadd.f32 %v1044, %v1156
        %1158 = vmatmul.f32.gmra.mxu0 %v387
        %v1159 = vpop.f32.mrf.mxu0
        %v1160 = vadd.f32 %v1047, %v1159
        %1161 = vmatmul.f32.gmra.mxu0 %v390
        %v1162 = vpop.f32.mrf.mxu0
        %v1163 = vadd.f32 %v1050, %v1162
        %1164 = vmatmul.f32.gmra.mxu0 %v393
        %v1165 = vpop.f32.mrf.mxu0
        %v1166 = vadd.f32 %v1053, %v1165
        %1167 = vmatmul.f32.gmra.mxu0 %v396
        %v1168 = vpop.f32.mrf.mxu0
        %v1169 = vadd.f32 %v1056, %v1168
        %1170 = vmatmul.f32.gmra.mxu0 %v399
        %v1171 = vpop.f32.mrf.mxu0
        %v1172 = vadd.f32 %v1059, %v1171
        %1173 = vmatmul.f32.gmra.mxu0 %v402
        %v1174 = vpop.f32.mrf.mxu0
        %v1175 = vadd.f32 %v1062, %v1174
        %1176 = vmatmul.f32.gmra.mxu0 %v405
        %v1177 = vpop.f32.mrf.mxu0
        %v1178 = vadd.f32 %v1065, %v1177
        %1179 = vmatmul.f32.gmra.mxu0 %v408
        %v1180 = vpop.f32.mrf.mxu0
        %v1181 = vadd.f32 %v1068, %v1180
        %1182 = vmatmul.f32.gmra.mxu0 %v411
        %v1183 = vpop.f32.mrf.mxu0
        %v1184 = vadd.f32 %v1071, %v1183
        %1185 = vmatmul.f32.gmra.mxu0 %v414
        %v1186 = vpop.f32.mrf.mxu0
        %v1187 = vadd.f32 %v1074, %v1186
        %1188 = vmatmul.f32.gmra.mxu0 %v417
        %v1189 = vpop.f32.mrf.mxu0
        %v1190 = vadd.f32 %v1077, %v1189
        %1191 = vmatmul.f32.gmra.mxu0 %v420
        %v1192 = vpop.f32.mrf.mxu0
        %v1193 = vadd.f32 %v1080, %v1192
        %1194 = vmatmul.f32.gmra.mxu0 %v423
        %v1195 = vpop.f32.mrf.mxu0
        %v1196 = vadd.f32 %v1083, %v1195
        %1197 = vmatmul.f32.gmra.mxu0 %v426
        %v1198 = vpop.f32.mrf.mxu0
        %v1199 = vadd.f32 %v1086, %v1198
        %1200 = vmatmul.f32.gmra.mxu0 %v429
        %v1201 = vpop.f32.mrf.mxu0
        %v1202 = vadd.f32 %v1089, %v1201
        %1203 = vmatmul.f32.gmra.mxu0 %v432
        %v1204 = vpop.f32.mrf.mxu0
        %v1205 = vadd.f32 %v1092, %v1204
        %1206 = vmatmul.f32.gmra.mxu0 %v435
        %v1207 = vpop.f32.mrf.mxu0
        %v1208 = vadd.f32 %v1095, %v1207
        %1209 = vmatmul.f32.gmra.mxu0 %v438
        %v1210 = vpop.f32.mrf.mxu0
        %v1211 = vadd.f32 %v1098, %v1210
        %1212 = vmatmul.f32.gmra.mxu0 %v441
        %v1213 = vpop.f32.mrf.mxu0
        %v1214 = vadd.f32 %v1101, %v1213
        %1215 = vmatmul.f32.gmra.mxu0 %v444
        %v1216 = vpop.f32.mrf.mxu0
        %v1217 = vadd.f32 %v1104, %v1216
        %1218 = vmatmul.f32.gmra.mxu0 %v447
        %v1219 = vpop.f32.mrf.mxu0
        %v1220 = vadd.f32 %v1107, %v1219
        %1221 = vmatmul.f32.gmra.mxu0 %v450
        %v1222 = vpop.f32.mrf.mxu0
        %v1223 = vadd.f32 %v1110, %v1222
        %1224 = vmatmul.f32.gmra.mxu0 %v453
        %v1225 = vpop.f32.mrf.mxu0
        %v1226 = vadd.f32 %v1113, %v1225
        %1227 = vdwg.mxu0
        %v1228 = vadd.f32 %v294, %v794
        %v1229 = vadd.f32 %v295, %v1133
        %v1230 = vadd.f32 %v296, %v797
        %v1231 = vadd.f32 %v297, %v1136
        %v1232 = vadd.f32 %v298, %v800
        %v1233 = vadd.f32 %v299, %v1139
        %v1234 = vadd.f32 %v300, %v803
        %v1235 = vadd.f32 %v301, %v1142
        %v1236 = vadd.f32 %v302, %v806
        %v1237 = vadd.f32 %v303, %v1145
        %v1238 = vadd.f32 %v304, %v809
        %v1239 = vadd.f32 %v305, %v1148
        %v1240 = vadd.f32 %v306, %v812
        %v1241 = vadd.f32 %v307, %v1151
        %v1242 = vadd.f32 %v308, %v815
        %v1243 = vadd.f32 %v309, %v1154
        %v1244 = vadd.f32 %v310, %v818
        %v1245 = vadd.f32 %v311, %v1157
        %v1246 = vadd.f32 %v312, %v821
        %v1247 = vadd.f32 %v313, %v1160
        %v1248 = vadd.f32 %v314, %v824
        %v1249 = vadd.f32 %v315, %v1163
        %v1250 = vadd.f32 %v316, %v827
        %v1251 = vadd.f32 %v317, %v1166
        %v1252 = vadd.f32 %v318, %v830
        %v1253 = vadd.f32 %v319, %v1169
        %v1254 = vadd.f32 %v320, %v833
        %v1255 = vadd.f32 %v321, %v1172
        %v1256 = vadd.f32 %v322, %v836
        %v1257 = vadd.f32 %v323, %v1175
        %v1258 = vadd.f32 %v324, %v839
        %v1259 = vadd.f32 %v325, %v1178
        %v1260 = vadd.f32 %v326, %v842
        %v1261 = vadd.f32 %v327, %v1181
        %v1262 = vadd.f32 %v328, %v845
        %v1263 = vadd.f32 %v329, %v1184
        %v1264 = vadd.f32 %v330, %v848
        %v1265 = vadd.f32 %v331, %v1187
        %v1266 = vadd.f32 %v332, %v851
        %v1267 = vadd.f32 %v333, %v1190
        %v1268 = vadd.f32 %v334, %v854
        %v1269 = vadd.f32 %v335, %v1193
        %v1270 = vadd.f32 %v336, %v857
        %v1271 = vadd.f32 %v337, %v1196
        %v1272 = vadd.f32 %v338, %v860
        %v1273 = vadd.f32 %v339, %v1199
        %v1274 = vadd.f32 %v340, %v863
        %v1275 = vadd.f32 %v341, %v1202
        %v1276 = vadd.f32 %v342, %v866
        %v1277 = vadd.f32 %v343, %v1205
        %v1278 = vadd.f32 %v344, %v869
        %v1279 = vadd.f32 %v345, %v1208
        %v1280 = vadd.f32 %v346, %v872
        %v1281 = vadd.f32 %v347, %v1211
        %v1282 = vadd.f32 %v348, %v875
        %v1283 = vadd.f32 %v349, %v1214
        %v1284 = vadd.f32 %v350, %v878
        %v1285 = vadd.f32 %v351, %v1217
        %v1286 = vadd.f32 %v352, %v881
        %v1287 = vadd.f32 %v353, %v1220
        %v1288 = vadd.f32 %v354, %v884
        %v1289 = vadd.f32 %v355, %v1223
        %v1290 = vadd.f32 %v356, %v887
        %v1291 = vadd.f32 %v357, %v1226
        %1292 = vst [vmem:[%s219] sm:$0xff] %v1228
        %1293 = vst [vmem:[%s219 + $0x8] sm:$0xff] %v1229
        %1294 = vst [vmem:[%s219 + $0x10] sm:$0xff] %v1230
        %1295 = vst [vmem:[%s219 + $0x18] sm:$0xff] %v1231
        %1296 = vst [vmem:[%s219 + $0x20] sm:$0xff] %v1232
        %1297 = vst [vmem:[%s219 + $0x28] sm:$0xff] %v1233
        %1298 = vst [vmem:[%s219 + $0x30] sm:$0xff] %v1234
        %1299 = vst [vmem:[%s219 + $0x38] sm:$0xff] %v1235
        %1300 = vst [vmem:[%s219 + $0x40] sm:$0xff] %v1236
        %1301 = vst [vmem:[%s219 + $0x48] sm:$0xff] %v1237
        %1302 = vst [vmem:[%s219 + $0x50] sm:$0xff] %v1238
        %1303 = vst [vmem:[%s219 + $0x58] sm:$0xff] %v1239
        %1304 = vst [vmem:[%s219 + $0x60] sm:$0xff] %v1240
        %1305 = vst [vmem:[%s219 + $0x68] sm:$0xff] %v1241
        %1306 = vst [vmem:[%s219 + $0x70] sm:$0xff] %v1242
        %1307 = vst [vmem:[%s219 + $0x78] sm:$0xff] %v1243
        %1308 = vst [vmem:[%s219 + $0x80] sm:$0xff] %v1244
        %1309 = vst [vmem:[%s219 + $0x88] sm:$0xff] %v1245
        %1310 = vst [vmem:[%s219 + $0x90] sm:$0xff] %v1246
        %1311 = vst [vmem:[%s219 + $0x98] sm:$0xff] %v1247
        %1312 = vst [vmem:[%s219 + $0xa0] sm:$0xff] %v1248
        %1313 = vst [vmem:[%s219 + $0xa8] sm:$0xff] %v1249
        %1314 = vst [vmem:[%s219 + $0xb0] sm:$0xff] %v1250
        %1315 = vst [vmem:[%s219 + $0xb8] sm:$0xff] %v1251
        %1316 = vst [vmem:[%s219 + $0xc0] sm:$0xff] %v1252
        %1317 = vst [vmem:[%s219 + $0xc8] sm:$0xff] %v1253
        %1318 = vst [vmem:[%s219 + $0xd0] sm:$0xff] %v1254
        %1319 = vst [vmem:[%s219 + $0xd8] sm:$0xff] %v1255
        %1320 = vst [vmem:[%s219 + $0xe0] sm:$0xff] %v1256
        %1321 = vst [vmem:[%s219 + $0xe8] sm:$0xff] %v1257
        %1322 = vst [vmem:[%s219 + $0xf0] sm:$0xff] %v1258
        %1323 = vst [vmem:[%s219 + $0xf8] sm:$0xff] %v1259
        %1324 = vst [vmem:[%s219 + $0x100] sm:$0xff] %v1260
        %1325 = vst [vmem:[%s219 + $0x108] sm:$0xff] %v1261
        %1326 = vst [vmem:[%s219 + $0x110] sm:$0xff] %v1262
        %1327 = vst [vmem:[%s219 + $0x118] sm:$0xff] %v1263
        %1328 = vst [vmem:[%s219 + $0x120] sm:$0xff] %v1264
        %1329 = vst [vmem:[%s219 + $0x128] sm:$0xff] %v1265
        %1330 = vst [vmem:[%s219 + $0x130] sm:$0xff] %v1266
        %1331 = vst [vmem:[%s219 + $0x138] sm:$0xff] %v1267
        %1332 = vst [vmem:[%s219 + $0x140] sm:$0xff] %v1268
        %1333 = vst [vmem:[%s219 + $0x148] sm:$0xff] %v1269
        %1334 = vst [vmem:[%s219 + $0x150] sm:$0xff] %v1270
        %1335 = vst [vmem:[%s219 + $0x158] sm:$0xff] %v1271
        %1336 = vst [vmem:[%s219 + $0x160] sm:$0xff] %v1272
        %1337 = vst [vmem:[%s219 + $0x168] sm:$0xff] %v1273
        %1338 = vst [vmem:[%s219 + $0x170] sm:$0xff] %v1274
        %1339 = vst [vmem:[%s219 + $0x178] sm:$0xff] %v1275
        %1340 = vst [vmem:[%s219 + $0x180] sm:$0xff] %v1276
        %1341 = vst [vmem:[%s219 + $0x188] sm:$0xff] %v1277
        %1342 = vst [vmem:[%s219 + $0x190] sm:$0xff] %v1278
        %1343 = vst [vmem:[%s219 + $0x198] sm:$0xff] %v1279
        %1344 = vst [vmem:[%s219 + $0x1a0] sm:$0xff] %v1280
        %1345 = vst [vmem:[%s219 + $0x1a8] sm:$0xff] %v1281
        %1346 = vst [vmem:[%s219 + $0x1b0] sm:$0xff] %v1282
        %1347 = vst [vmem:[%s219 + $0x1b8] sm:$0xff] %v1283
        %1348 = vst [vmem:[%s219 + $0x1c0] sm:$0xff] %v1284
        %1349 = vst [vmem:[%s219 + $0x1c8] sm:$0xff] %v1285
        %1350 = vst [vmem:[%s219 + $0x1d0] sm:$0xff] %v1286
        %1351 = vst [vmem:[%s219 + $0x1d8] sm:$0xff] %v1287
        %1352 = vst [vmem:[%s219 + $0x1e0] sm:$0xff] %v1288
        %1353 = vst [vmem:[%s219 + $0x1e8] sm:$0xff] %v1289
        %1354 = vst [vmem:[%s219 + $0x1f0] sm:$0xff] %v1290
        %1355 = vst [vmem:[%s219 + $0x1f8] sm:$0xff] %v1291
        %s1356 = sand.u32 %s105, 1
        %s1357 = scalar_lea.sflag [#allocation4], %s1356
        %s1358 = sand.u32 %s105, 1
        %s1359 = smul.addr %s1358, 512
        %s1360 = scalar_lea.vmem [#allocation7], %s1359
        // Predicated region
        $region41: #{pallas_matmul.1} parent=27 // pred_check
          %p1361 = pneg %p115
        $region42: #{pallas_matmul.1} parent=27 // pred_check_branch
          %1363 = sbr.rel (%p1361) target = $region44
        $region43: #{pallas_matmul.1} parent=27 // pred_region
          %s1364 = smul.u32 32, %s25
          %s1365 = smul.u32 2, %s26
          %1367 = vsyncadd %s1357, 0
          %s1368 = smul.addr %s1364, 4
          %s1369 = sadd.s32 %s1365, %s1368
          %s1370 = smul.addr %s1369, 8
          %s1371 = scalar_lea.hbm %s2, %s1370
          %s1372 = sshll.u32 %s1360, 4
          %s1373 = int_to_ptr.vmem [resolvable:$true] %s1372
          %s1374 = sshll.u32 %s1371, 4
          %s1375 = int_to_ptr.hbm [resolvable:$true] %s1374
          %1380 = dma.vmem_to_hbm [thread:$0]  %s1373, 8192, %s1375, %s1357, 256, 512, 16
        $region44: #{pallas_matmul.1} parent=27 // pred_fallthru
          _
      $region28: #{pallas_matmul.1} parent=5 // pred_fallthru
        _
      %p1381 = scmp.le.s32.totalorder 2, %s15
      // Predicated region
      $region45: #{pallas_matmul.1} parent=5 // pred_check
        %p1382 = pneg %p1381
      $region46: #{pallas_matmul.1} parent=5 // pred_check_branch
        %1384 = sbr.rel (%p1382) target = $region48
      $region47: #{pallas_matmul.1} parent=5 // pred_region
        %s1385 = ssub.s32 %s15, 2
        // Predicated region
        $region49: #{pallas_matmul.1} parent=47 // pred_check
          %p1386 = pneg %p121
        $region50: #{pallas_matmul.1} parent=47 // pred_check_branch
          %1388 = sbr.rel (%p1386) target = $region52
        $region51: #{pallas_matmul.1} parent=47 // pred_region
          %s1389 = sand.u32 %s106, 1
          %s1390 = scalar_lea.sflag [#allocation4], %s1389
          %s1391 = sand.u32 %s106, 1
          %s1392 = smul.addr %s1391, 512
          %s1393 = scalar_lea.vmem [#allocation7], %s1392
          %1395 = dma.done %s1390, 8192
        $region52: #{pallas_matmul.1} parent=47 // pred_fallthru
          _
      $region48: #{pallas_matmul.1} parent=5 // pred_fallthru
        _
    $region6: #{pallas_matmul.1} parent=1 // loop_footer
      %s19 = sadd.s32 1, %s15
    $region7: #{pallas_matmul.1} parent=1 // loop_footer_branch
      %14 = sbr.rel target = $region3
    $region8: #{pallas_matmul.1} parent=1 // loop_exit
      _
    %1396 = vsyncpa [#allocation3], 1
    %s1397 = scalar_lea.sflag [#allocation3], 1
    %1398 = vsyncpa %s1397, 1
    %1399 = vsyncpa [#allocation6], 1
    %s1400 = scalar_lea.sflag [#allocation6], 1
    %1401 = vsyncpa %s1400, 1
    %1402 = vsyncpa [#allocation4], 1
    %s1403 = scalar_lea.sflag [#allocation4], 1
    %1404 = vsyncpa %s1403, 1

</llo_original>
